<compile_context>
chip_gen: v5e
topology: v5e:2x2
jax: 0.10.0
libtpu: 0.0.40
codegen_flags: <defaults>
</compile_context>

<pallas_src>
import functools

import numpy as np
import jax
import jax.numpy as jnp
from jax.experimental import pallas as pl
from jax.experimental.pallas import tpu as pltpu


def _round_up(n, m):
    return (n + m - 1) // m * m


def _relu(v):
    return jnp.maximum(v, 0.0)


# ------------------------------ fused kernel ------------------------------- #

def _birnn_fused_kernel(*refs, num_layers, act, T, Bp, Hp, slab_dtype):
    """Fully fused BiRNN forward (all layers, both directions, final FC).

    Inputs (whole-array resident in VMEM):
      refs[0]                    : x2      (T*Bp, D)   sequence-major, batch-padded
      per layer l (3 refs each)  : wih_l   (D_l, 2Hp)  lane-concatenated [fwd | bwd]
                                   whh_l   (2Hp, 2Hp)  block-diag(whh_f, whh_b)
                                   b_l     (1, 2Hp)    concatenated (b_ih + b_hh)
      then                       : wfc_f (Hp, Op), wfc_b (Hp, Op), b_fc (1, Op)
    Output:
      out_ref (Bp, Op)
    Scratch (VMEM):
      two (T*Bp, 2Hp) activation slabs, ping-pong across layers.

    Slab layout ("reversed staging"): row block r holds
      cols [0:Hp]   -> forward  direction, time r
      cols [Hp:2Hp] -> backward direction, time T-1-r
    so recurrence iteration t loads/stores exactly row block t (full tile).
    """
    n_in = 1 + 3 * num_layers + 3
    x_ref = refs[0]
    layer_refs = refs[1:1 + 3 * num_layers]
    wfcf_ref, wfcb_ref, bfc_ref = refs[1 + 3 * num_layers:n_in]
    out_ref = refs[n_in]
    slabs = (refs[n_in + 1], refs[n_in + 2])
    H2 = 2 * Hp

    h = None
    for l in range(num_layers):
        wih = layer_refs[3 * l + 0][...]
        whh = layer_refs[3 * l + 1][...]
        b = layer_refs[3 * l + 2][...]
        dst = slabs[l % 2]

        # (1) Hoisted, lane-dense input projection: ONE big GEMM per layer,
        #     completely off the serial critical path.
        # TODO(synk): chunk this over row blocks (lax.fori_loop) for large T*Bp to
        #             bound vreg live ranges and overlap slab stores with matmuls.
        if l == 0:
            inp = x_ref[...]                                    # (T*Bp, D), time order
        else:
            # Un-reverse the bwd half of the previous slab to recover the
            # time-ordered [h_fwd(t) | h_bwd(t)] features (R is an involution).
            src = slabs[(l - 1) % 2]
            blocks = []
            for t in range(T):
                a = src[pl.ds(t * Bp, Bp), :].astype(jnp.float32)
                r = src[pl.ds((T - 1 - t) * Bp, Bp), :].astype(jnp.float32)
                blocks.append(jnp.concatenate([a[:, :Hp], r[:, Hp:]], axis=-1))
            inp = jnp.concatenate(blocks, axis=0)               # (T*Bp, 2Hp)
        gates = jnp.dot(inp, wih, preferred_element_type=jnp.float32) + b

        # (2) Stage gates into the slab in "reversed staging" layout:
        #     fwd half time-ordered, bwd half time-reversed (full-tile stores).
        for t in range(T):
            tb = T - 1 - t
            g = jnp.concatenate([gates[t * Bp:(t + 1) * Bp, :Hp],
                                 gates[tb * Bp:(tb + 1) * Bp, Hp:]], axis=-1)
            dst[pl.ds(t * Bp, Bp), :] = g.astype(slab_dtype)

        # (3) Serial recurrence: both directions advanced by ONE fused
        #     (Bp, 2Hp) @ (2Hp, 2Hp) block-diagonal matmul per timestep, with a
        #     single full-tile slab load and store. Carry stays f32.
        # TODO(synk): switch to lax.fori_loop(..., unroll=4..8) once T grows past ~32.
        h = jnp.zeros((Bp, H2), jnp.float32)
        for t in range(T):
            g = dst[pl.ds(t * Bp, Bp), :].astype(jnp.float32)
            h = act(g + jnp.dot(h, whh, preferred_element_type=jnp.float32))
            dst[pl.ds(t * Bp, Bp), :] = h.astype(slab_dtype)

    # (4) Fused FC on the last timestep of the top layer:
    #     h_fwd(T-1) is the final forward carry; h_bwd(T-1) was stored at row
    #     block 0 (reversed layout). Split matmul with host-pre-split W_fc halves.
    top = slabs[(num_layers - 1) % 2]
    last_f = h[:, :Hp]
    last_b = top[pl.ds(0, Bp), :].astype(jnp.float32)[:, Hp:]
    out = (jnp.dot(last_f, wfcf_ref[...], preferred_element_type=jnp.float32)
           + jnp.dot(last_b, wfcb_ref[...], preferred_element_type=jnp.float32)
           + bfc_ref[...])
    out_ref[...] = out.astype(out_ref.dtype)


# --------------------------------- wrapper ---------------------------------- #

@functools.partial(jax.jit, static_argnames=("nonlinearity", "slab_dtype"))
def birnn_forward(x_btd, params, *, nonlinearity="tanh", slab_dtype=jnp.float32):
    """x_btd: (B, T, input_size) batch_first, like the PyTorch module."""
    if nonlinearity not in ("tanh", "relu"):
        raise ValueError(f"unsupported nonlinearity: {nonlinearity}")
    act = jnp.tanh if nonlinearity == "tanh" else _relu

    B, T, D = x_btd.shape
    layers = params["rnn"]
    num_layers = len(layers)
    H = layers[0]["whh_f"].shape[0]
    w_fc, b_fc = params["fc"]
    O = w_fc.shape[1]

    slab_itemsize = np.dtype(slab_dtype).itemsize
    sub = 8 * 4 // slab_itemsize            # full sublane tile: 8 rows f32, 16 rows bf16
    Bp = _round_up(B, sub)
    Hp = _round_up(H, 64)                   # 2*Hp is a multiple of the 128-lane width
    Op = _round_up(O, 128)                  # lane-dense output store
    f32 = jnp.float32

    # sequence-major, batch padded to a full sublane tile, flattened to 2-D so the
    # hoisted projections are plain GEMMs with no in-kernel reshapes.
    # TODO(synk): for large T*B*D feed x via a BlockSpec grid over T instead of a
    #             wrapper transpose + whole-array VMEM residency.
    xT = jnp.transpose(x_btd, (1, 0, 2)).astype(f32)
    xT = jnp.pad(xT, ((0, 0), (0, Bp - B), (0, 0)))
    x2 = xT.reshape(T * Bp, D)

    def put(shape, *pieces):
        w = jnp.zeros(shape, f32)
        for ro, co, blk in pieces:
            w = w.at[ro:ro + blk.shape[0], co:co + blk.shape[1]].set(blk.astype(f32))
        return w

    flat_inputs = [x2]
    for l, lyr in enumerate(layers):
        wih_f, wih_b = lyr["wih_f"], lyr["wih_b"]
        if l == 0:
            wih = put((D, 2 * Hp), (0, 0, wih_f), (0, Hp, wih_b))
        else:
            # previous layer features are ordered [fwd H | bwd H]; scatter those
            # rows into the padded [0:Hp | Hp:2Hp] feature layout.
            wih = put((2 * Hp, 2 * Hp),
                      (0, 0, wih_f[:H]), (Hp, 0, wih_f[H:]),
                      (0, Hp, wih_b[:H]), (Hp, Hp, wih_b[H:]))
        whh = put((2 * Hp, 2 * Hp), (0, 0, lyr["whh_f"]), (Hp, Hp, lyr["whh_b"]))
        bias = put((1, 2 * Hp), (0, 0, lyr["b_f"]), (0, Hp, lyr["b_b"]))
        flat_inputs += [wih, whh, bias]

    wfc_f = put((Hp, Op), (0, 0, w_fc[:H]))
    wfc_b = put((Hp, Op), (0, 0, w_fc[H:]))
    bfc = put((1, Op), (0, 0, b_fc))
    flat_inputs += [wfc_f, wfc_b, bfc]

    slab_shape = (T * Bp, 2 * Hp)
    slab_bytes = T * Bp * 2 * Hp * slab_itemsize
    in_bytes = sum(a.size * a.dtype.itemsize for a in flat_inputs)
    out_bytes = Bp * Op * np.dtype(x_btd.dtype).itemsize
    vmem_limit = max(2 * (in_bytes + out_bytes + 2 * slab_bytes) + (8 << 20), 32 << 20)
    vmem_limit = int(min(vmem_limit, 112 << 20))
    # TODO(synk): on v7x (64 MiB physical VMEM) gate full residency on this footprint
    #             and fall back to a tiled / chunked-projection variant.

    kernel = functools.partial(_birnn_fused_kernel, num_layers=num_layers,
                               act=act, T=T, Bp=Bp, Hp=Hp, slab_dtype=slab_dtype)

    out_p = pl.pallas_call(
        kernel,
        out_shape=jax.ShapeDtypeStruct((Bp, Op), x_btd.dtype),
        in_specs=[pl.BlockSpec(memory_space=pltpu.MemorySpace.VMEM)
                  for _ in flat_inputs],
        out_specs=pl.BlockSpec(memory_space=pltpu.MemorySpace.VMEM),
        scratch_shapes=[pltpu.VMEM(slab_shape, slab_dtype) for _ in range(2)],
        compiler_params=pltpu.CompilerParams(vmem_limit_bytes=vmem_limit),
    )(*flat_inputs)
    return out_p[:B, :O]


# ----------------------------- params & reference --------------------------- #

def init_params(key, input_size, hidden_size, num_layers, output_size):
    k = 1.0 / jnp.sqrt(hidden_size)
    layers = []
    for l in range(num_layers):
        d_in = input_size if l == 0 else 2 * hidden_size
        lyr = {}
        for name in ("f", "b"):
            key, k1, k2, k3, k4 = jax.random.split(key, 5)
            lyr["wih_" + name] = jax.random.uniform(
                k1, (d_in, hidden_size), jnp.float32, -k, k)
            lyr["whh_" + name] = jax.random.uniform(
                k2, (hidden_size, hidden_size), jnp.float32, -k, k)
            b_ih = jax.random.uniform(k3, (hidden_size,), jnp.float32, -k, k)
            b_hh = jax.random.uniform(k4, (hidden_size,), jnp.float32, -k, k)
            lyr["b_" + name] = (b_ih + b_hh)[None, :]
        layers.append(lyr)
    key, k1, k2 = jax.random.split(key, 3)
    kf = 1.0 / jnp.sqrt(2 * hidden_size)
    w_fc = jax.random.uniform(k1, (2 * hidden_size, output_size), jnp.float32, -kf, kf)
    b_fc = jax.random.uniform(k2, (output_size,), jnp.float32, -kf, kf)[None, :]
    return {"rnn": layers, "fc": (w_fc, b_fc)}


def ref_forward(x_btd, params, nonlinearity="tanh"):
    """Pure-JAX reference matching the PyTorch module (eval mode)."""
    act = jnp.tanh if nonlinearity == "tanh" else _relu
    x = jnp.transpose(x_btd, (1, 0, 2))  # (T, B, D)

    def run(seq, wih, whh, b):
        Bb = seq.shape[1]
        Hh = whh.shape[0]
        h = jnp.zeros((Bb, Hh), jnp.float32)
        outs = []
        for t in range(seq.shape[0]):
            h = act(seq[t] @ wih + h @ whh + b)
            outs.append(h)
        return jnp.stack(outs, 0)

    for lyr in params["rnn"]:
        of = run(x, lyr["wih_f"], lyr["whh_f"], lyr["b_f"])
        ob = run(x[::-1], lyr["wih_b"], lyr["whh_b"], lyr["b_b"])[::-1]
        x = jnp.concatenate([of, ob], -1)
    w_fc, b_fc = params["fc"]
    return x[-1] @ w_fc + b_fc


# ----------------------------------- main ------------------------------------ #

if __name__ == "__main__":
    B, T = 2, 8
    input_size, hidden_size, num_layers, output_size = 16, 32, 2, 50

    key = jax.random.PRNGKey(0)
    key, kx, kp = jax.random.split(key, 3)
    x = jax.random.normal(kx, (B, T, input_size), jnp.float32)
    params = init_params(kp, input_size, hidden_size, num_layers, output_size)

    # f32 activation slabs: bit-for-bit-ish vs the pure-JAX reference.
    for nonlin in ("tanh", "relu"):
        out = jax.block_until_ready(birnn_forward(x, params, nonlinearity=nonlin))
        assert out.shape == (B, output_size), out.shape
        ref = jax.block_until_ready(ref_forward(x, params, nonlin))
        err = float(jnp.max(jnp.abs(out - ref)))
        assert jnp.allclose(out, ref, atol=1e-4, rtol=1e-4), (nonlin, err)

    # bf16 activation slabs (storage only; carries / MXU accumulation stay f32):
    # halves slab VMEM + hot-loop slab bytes. Looser tolerance vs f32 reference.
    out_bf16 = jax.block_until_ready(
        birnn_forward(x, params, nonlinearity="tanh", slab_dtype=jnp.bfloat16))
    ref = jax.block_until_ready(ref_forward(x, params, "tanh"))
    err_bf16 = float(jnp.max(jnp.abs(out_bf16 - ref)))
    assert jnp.allclose(out_bf16, ref, atol=2e-1, rtol=2e-1), err_bf16

    print("KERNEL_OK")
</pallas_src>

<mosaic_0001>
module attributes {stable_mosaic.version = 11 : i64} {
  func.func @_birnn_fused_kernel(%arg0: memref<64x16xf32, #tpu.memory_space<vmem>>, %arg1: memref<16x128xf32, #tpu.memory_space<vmem>>, %arg2: memref<128x128xf32, #tpu.memory_space<vmem>>, %arg3: memref<1x128xf32, #tpu.memory_space<vmem>>, %arg4: memref<128x128xf32, #tpu.memory_space<vmem>>, %arg5: memref<128x128xf32, #tpu.memory_space<vmem>>, %arg6: memref<1x128xf32, #tpu.memory_space<vmem>>, %arg7: memref<64x128xf32, #tpu.memory_space<vmem>>, %arg8: memref<64x128xf32, #tpu.memory_space<vmem>>, %arg9: memref<1x128xf32, #tpu.memory_space<vmem>>, %arg10: memref<8x128xf32, #tpu.memory_space<vmem>>, %arg11: memref<64x128xf32, #tpu.memory_space<vmem>>, %arg12: memref<64x128xf32, #tpu.memory_space<vmem>>) attributes {dimension_semantics = [], scalar_prefetch = 0 : i64, scratch_operands = 2 : i64, tpu.core_type = #tpu.core_type<tc>} {
    %c0 = arith.constant 0 : index
    %c0_0 = arith.constant 0 : index
    %0 = vector.load %arg1[%c0, %c0_0] : memref<16x128xf32, #tpu.memory_space<vmem>>, vector<16x128xf32>
    %c0_1 = arith.constant 0 : index
    %c0_2 = arith.constant 0 : index
    %1 = vector.load %arg2[%c0_1, %c0_2] : memref<128x128xf32, #tpu.memory_space<vmem>>, vector<128x128xf32>
    %c0_3 = arith.constant 0 : index
    %c0_4 = arith.constant 0 : index
    %2 = vector.load %arg3[%c0_3, %c0_4] : memref<1x128xf32, #tpu.memory_space<vmem>>, vector<1x128xf32>
    %c0_5 = arith.constant 0 : index
    %c0_6 = arith.constant 0 : index
    %3 = vector.load %arg0[%c0_5, %c0_6] : memref<64x16xf32, #tpu.memory_space<vmem>>, vector<64x16xf32>
    %cst = arith.constant dense<0.000000e+00> : vector<64x128xf32>
    %4 = tpu.matmul %3, %0, %cst {dimension_numbers = #tpu.dot_dimension_numbers<[1], [0], [0], [1], [0, 0, 1, 1], [], []>} : vector<64x16xf32>, vector<16x128xf32>, vector<64x128xf32> -> vector<64x128xf32>
    %5 = vector.broadcast %2 : vector<1x128xf32> to vector<64x128xf32>
    %6 = arith.addf %4, %5 : vector<64x128xf32>
    %7 = vector.extract_strided_slice %6 {offsets = [0, 0], sizes = [8, 64], strides = [1, 1]} : vector<64x128xf32> to vector<8x64xf32>
    %8 = vector.extract_strided_slice %6 {offsets = [56, 64], sizes = [8, 64], strides = [1, 1]} : vector<64x128xf32> to vector<8x64xf32>
    %9 = tpu.concatenate %7, %8 in 1 : vector<8x64xf32>, vector<8x64xf32> -> vector<8x128xf32>
    %c0_7 = arith.constant 0 : index
    %c0_8 = arith.constant 0 : index
    %10 = vector.load %arg11[%c0_7, %c0_8] : memref<64x128xf32, #tpu.memory_space<vmem>>, vector<8x128xf32>
    tpu.vector_store %arg11[%c0_7, %c0_8], %9 {strides = array<i32>} : memref<64x128xf32, #tpu.memory_space<vmem>>, vector<8x128xf32>,
    %11 = vector.extract_strided_slice %6 {offsets = [8, 0], sizes = [8, 64], strides = [1, 1]} : vector<64x128xf32> to vector<8x64xf32>
    %12 = vector.extract_strided_slice %6 {offsets = [48, 64], sizes = [8, 64], strides = [1, 1]} : vector<64x128xf32> to vector<8x64xf32>
    %13 = tpu.concatenate %11, %12 in 1 : vector<8x64xf32>, vector<8x64xf32> -> vector<8x128xf32>
    %c8 = arith.constant 8 : index
    %c0_9 = arith.constant 0 : index
    %14 = vector.load %arg11[%c8, %c0_9] : memref<64x128xf32, #tpu.memory_space<vmem>>, vector<8x128xf32>
    tpu.vector_store %arg11[%c8, %c0_9], %13 {strides = array<i32>} : memref<64x128xf32, #tpu.memory_space<vmem>>, vector<8x128xf32>,
    %15 = vector.extract_strided_slice %6 {offsets = [16, 0], sizes = [8, 64], strides = [1, 1]} : vector<64x128xf32> to vector<8x64xf32>
    %16 = vector.extract_strided_slice %6 {offsets = [40, 64], sizes = [8, 64], strides = [1, 1]} : vector<64x128xf32> to vector<8x64xf32>
    %17 = tpu.concatenate %15, %16 in 1 : vector<8x64xf32>, vector<8x64xf32> -> vector<8x128xf32>
    %c16 = arith.constant 16 : index
    %c0_10 = arith.constant 0 : index
    %18 = vector.load %arg11[%c16, %c0_10] : memref<64x128xf32, #tpu.memory_space<vmem>>, vector<8x128xf32>
    tpu.vector_store %arg11[%c16, %c0_10], %17 {strides = array<i32>} : memref<64x128xf32, #tpu.memory_space<vmem>>, vector<8x128xf32>,
    %19 = vector.extract_strided_slice %6 {offsets = [24, 0], sizes = [8, 64], strides = [1, 1]} : vector<64x128xf32> to vector<8x64xf32>
    %20 = vector.extract_strided_slice %6 {offsets = [32, 64], sizes = [8, 64], strides = [1, 1]} : vector<64x128xf32> to vector<8x64xf32>
    %21 = tpu.concatenate %19, %20 in 1 : vector<8x64xf32>, vector<8x64xf32> -> vector<8x128xf32>
    %c24 = arith.constant 24 : index
    %c0_11 = arith.constant 0 : index
    %22 = vector.load %arg11[%c24, %c0_11] : memref<64x128xf32, #tpu.memory_space<vmem>>, vector<8x128xf32>
    tpu.vector_store %arg11[%c24, %c0_11], %21 {strides = array<i32>} : memref<64x128xf32, #tpu.memory_space<vmem>>, vector<8x128xf32>,
    %23 = vector.extract_strided_slice %6 {offsets = [32, 0], sizes = [8, 64], strides = [1, 1]} : vector<64x128xf32> to vector<8x64xf32>
    %24 = vector.extract_strided_slice %6 {offsets = [24, 64], sizes = [8, 64], strides = [1, 1]} : vector<64x128xf32> to vector<8x64xf32>
    %25 = tpu.concatenate %23, %24 in 1 : vector<8x64xf32>, vector<8x64xf32> -> vector<8x128xf32>
    %c32 = arith.constant 32 : index
    %c0_12 = arith.constant 0 : index
    %26 = vector.load %arg11[%c32, %c0_12] : memref<64x128xf32, #tpu.memory_space<vmem>>, vector<8x128xf32>
    tpu.vector_store %arg11[%c32, %c0_12], %25 {strides = array<i32>} : memref<64x128xf32, #tpu.memory_space<vmem>>, vector<8x128xf32>,
    %27 = vector.extract_strided_slice %6 {offsets = [40, 0], sizes = [8, 64], strides = [1, 1]} : vector<64x128xf32> to vector<8x64xf32>
    %28 = vector.extract_strided_slice %6 {offsets = [16, 64], sizes = [8, 64], strides = [1, 1]} : vector<64x128xf32> to vector<8x64xf32>
    %29 = tpu.concatenate %27, %28 in 1 : vector<8x64xf32>, vector<8x64xf32> -> vector<8x128xf32>
    %c40 = arith.constant 40 : index
    %c0_13 = arith.constant 0 : index
    %30 = vector.load %arg11[%c40, %c0_13] : memref<64x128xf32, #tpu.memory_space<vmem>>, vector<8x128xf32>
    tpu.vector_store %arg11[%c40, %c0_13], %29 {strides = array<i32>} : memref<64x128xf32, #tpu.memory_space<vmem>>, vector<8x128xf32>,
    %31 = vector.extract_strided_slice %6 {offsets = [48, 0], sizes = [8, 64], strides = [1, 1]} : vector<64x128xf32> to vector<8x64xf32>
    %32 = vector.extract_strided_slice %6 {offsets = [8, 64], sizes = [8, 64], strides = [1, 1]} : vector<64x128xf32> to vector<8x64xf32>
    %33 = tpu.concatenate %31, %32 in 1 : vector<8x64xf32>, vector<8x64xf32> -> vector<8x128xf32>
    %c48 = arith.constant 48 : index
    %c0_14 = arith.constant 0 : index
    %34 = vector.load %arg11[%c48, %c0_14] : memref<64x128xf32, #tpu.memory_space<vmem>>, vector<8x128xf32>
    tpu.vector_store %arg11[%c48, %c0_14], %33 {strides = array<i32>} : memref<64x128xf32, #tpu.memory_space<vmem>>, vector<8x128xf32>,
    %35 = vector.extract_strided_slice %6 {offsets = [56, 0], sizes = [8, 64], strides = [1, 1]} : vector<64x128xf32> to vector<8x64xf32>
    %36 = vector.extract_strided_slice %6 {offsets = [0, 64], sizes = [8, 64], strides = [1, 1]} : vector<64x128xf32> to vector<8x64xf32>
    %37 = tpu.concatenate %35, %36 in 1 : vector<8x64xf32>, vector<8x64xf32> -> vector<8x128xf32>
    %c56 = arith.constant 56 : index
    %c0_15 = arith.constant 0 : index
    %38 = vector.load %arg11[%c56, %c0_15] : memref<64x128xf32, #tpu.memory_space<vmem>>, vector<8x128xf32>
    tpu.vector_store %arg11[%c56, %c0_15], %37 {strides = array<i32>} : memref<64x128xf32, #tpu.memory_space<vmem>>, vector<8x128xf32>,
    %cst_16 = arith.constant 0.000000e+00 : f32
    %39 = vector.broadcast %cst_16 : f32 to vector<8x128xf32>
    %c0_17 = arith.constant 0 : index
    %c0_18 = arith.constant 0 : index
    %40 = vector.load %arg11[%c0_17, %c0_18] : memref<64x128xf32, #tpu.memory_space<vmem>>, vector<8x128xf32>
    %cst_19 = arith.constant dense<0.000000e+00> : vector<8x128xf32>
    %41 = tpu.matmul %39, %1, %cst_19 {dimension_numbers = #tpu.dot_dimension_numbers<[1], [0], [0], [1], [0, 0, 1, 1], [], []>} : vector<8x128xf32>, vector<128x128xf32>, vector<8x128xf32> -> vector<8x128xf32>
    %42 = arith.addf %40, %41 : vector<8x128xf32>
    %43 = math.tanh %42 : vector<8x128xf32>
    %c0_20 = arith.constant 0 : index
    %c0_21 = arith.constant 0 : index
    %44 = vector.load %arg11[%c0_20, %c0_21] : memref<64x128xf32, #tpu.memory_space<vmem>>, vector<8x128xf32>
    tpu.vector_store %arg11[%c0_20, %c0_21], %43 {strides = array<i32>} : memref<64x128xf32, #tpu.memory_space<vmem>>, vector<8x128xf32>,
    %c8_22 = arith.constant 8 : index
    %c0_23 = arith.constant 0 : index
    %45 = vector.load %arg11[%c8_22, %c0_23] : memref<64x128xf32, #tpu.memory_space<vmem>>, vector<8x128xf32>
    %cst_24 = arith.constant dense<0.000000e+00> : vector<8x128xf32>
    %46 = tpu.matmul %43, %1, %cst_24 {dimension_numbers = #tpu.dot_dimension_numbers<[1], [0], [0], [1], [0, 0, 1, 1], [], []>} : vector<8x128xf32>, vector<128x128xf32>, vector<8x128xf32> -> vector<8x128xf32>
    %47 = arith.addf %45, %46 : vector<8x128xf32>
    %48 = math.tanh %47 : vector<8x128xf32>
    %c8_25 = arith.constant 8 : index
    %c0_26 = arith.constant 0 : index
    %49 = vector.load %arg11[%c8_25, %c0_26] : memref<64x128xf32, #tpu.memory_space<vmem>>, vector<8x128xf32>
    tpu.vector_store %arg11[%c8_25, %c0_26], %48 {strides = array<i32>} : memref<64x128xf32, #tpu.memory_space<vmem>>, vector<8x128xf32>,
    %c16_27 = arith.constant 16 : index
    %c0_28 = arith.constant 0 : index
    %50 = vector.load %arg11[%c16_27, %c0_28] : memref<64x128xf32, #tpu.memory_space<vmem>>, vector<8x128xf32>
    %cst_29 = arith.constant dense<0.000000e+00> : vector<8x128xf32>
    %51 = tpu.matmul %48, %1, %cst_29 {dimension_numbers = #tpu.dot_dimension_numbers<[1], [0], [0], [1], [0, 0, 1, 1], [], []>} : vector<8x128xf32>, vector<128x128xf32>, vector<8x128xf32> -> vector<8x128xf32>
    %52 = arith.addf %50, %51 : vector<8x128xf32>
    %53 = math.tanh %52 : vector<8x128xf32>
    %c16_30 = arith.constant 16 : index
    %c0_31 = arith.constant 0 : index
    %54 = vector.load %arg11[%c16_30, %c0_31] : memref<64x128xf32, #tpu.memory_space<vmem>>, vector<8x128xf32>
    tpu.vector_store %arg11[%c16_30, %c0_31], %53 {strides = array<i32>} : memref<64x128xf32, #tpu.memory_space<vmem>>, vector<8x128xf32>,
    %c24_32 = arith.constant 24 : index
    %c0_33 = arith.constant 0 : index
    %55 = vector.load %arg11[%c24_32, %c0_33] : memref<64x128xf32, #tpu.memory_space<vmem>>, vector<8x128xf32>
    %cst_34 = arith.constant dense<0.000000e+00> : vector<8x128xf32>
    %56 = tpu.matmul %53, %1, %cst_34 {dimension_numbers = #tpu.dot_dimension_numbers<[1], [0], [0], [1], [0, 0, 1, 1], [], []>} : vector<8x128xf32>, vector<128x128xf32>, vector<8x128xf32> -> vector<8x128xf32>
    %57 = arith.addf %55, %56 : vector<8x128xf32>
    %58 = math.tanh %57 : vector<8x128xf32>
    %c24_35 = arith.constant 24 : index
    %c0_36 = arith.constant 0 : index
    %59 = vector.load %arg11[%c24_35, %c0_36] : memref<64x128xf32, #tpu.memory_space<vmem>>, vector<8x128xf32>
    tpu.vector_store %arg11[%c24_35, %c0_36], %58 {strides = array<i32>} : memref<64x128xf32, #tpu.memory_space<vmem>>, vector<8x128xf32>,
    %c32_37 = arith.constant 32 : index
    %c0_38 = arith.constant 0 : index
    %60 = vector.load %arg11[%c32_37, %c0_38] : memref<64x128xf32, #tpu.memory_space<vmem>>, vector<8x128xf32>
    %cst_39 = arith.constant dense<0.000000e+00> : vector<8x128xf32>
    %61 = tpu.matmul %58, %1, %cst_39 {dimension_numbers = #tpu.dot_dimension_numbers<[1], [0], [0], [1], [0, 0, 1, 1], [], []>} : vector<8x128xf32>, vector<128x128xf32>, vector<8x128xf32> -> vector<8x128xf32>
    %62 = arith.addf %60, %61 : vector<8x128xf32>
    %63 = math.tanh %62 : vector<8x128xf32>
    %c32_40 = arith.constant 32 : index
    %c0_41 = arith.constant 0 : index
    %64 = vector.load %arg11[%c32_40, %c0_41] : memref<64x128xf32, #tpu.memory_space<vmem>>, vector<8x128xf32>
    tpu.vector_store %arg11[%c32_40, %c0_41], %63 {strides = array<i32>} : memref<64x128xf32, #tpu.memory_space<vmem>>, vector<8x128xf32>,
    %c40_42 = arith.constant 40 : index
    %c0_43 = arith.constant 0 : index
    %65 = vector.load %arg11[%c40_42, %c0_43] : memref<64x128xf32, #tpu.memory_space<vmem>>, vector<8x128xf32>
    %cst_44 = arith.constant dense<0.000000e+00> : vector<8x128xf32>
    %66 = tpu.matmul %63, %1, %cst_44 {dimension_numbers = #tpu.dot_dimension_numbers<[1], [0], [0], [1], [0, 0, 1, 1], [], []>} : vector<8x128xf32>, vector<128x128xf32>, vector<8x128xf32> -> vector<8x128xf32>
    %67 = arith.addf %65, %66 : vector<8x128xf32>
    %68 = math.tanh %67 : vector<8x128xf32>
    %c40_45 = arith.constant 40 : index
    %c0_46 = arith.constant 0 : index
    %69 = vector.load %arg11[%c40_45, %c0_46] : memref<64x128xf32, #tpu.memory_space<vmem>>, vector<8x128xf32>
    tpu.vector_store %arg11[%c40_45, %c0_46], %68 {strides = array<i32>} : memref<64x128xf32, #tpu.memory_space<vmem>>, vector<8x128xf32>,
    %c48_47 = arith.constant 48 : index
    %c0_48 = arith.constant 0 : index
    %70 = vector.load %arg11[%c48_47, %c0_48] : memref<64x128xf32, #tpu.memory_space<vmem>>, vector<8x128xf32>
    %cst_49 = arith.constant dense<0.000000e+00> : vector<8x128xf32>
    %71 = tpu.matmul %68, %1, %cst_49 {dimension_numbers = #tpu.dot_dimension_numbers<[1], [0], [0], [1], [0, 0, 1, 1], [], []>} : vector<8x128xf32>, vector<128x128xf32>, vector<8x128xf32> -> vector<8x128xf32>
    %72 = arith.addf %70, %71 : vector<8x128xf32>
    %73 = math.tanh %72 : vector<8x128xf32>
    %c48_50 = arith.constant 48 : index
    %c0_51 = arith.constant 0 : index
    %74 = vector.load %arg11[%c48_50, %c0_51] : memref<64x128xf32, #tpu.memory_space<vmem>>, vector<8x128xf32>
    tpu.vector_store %arg11[%c48_50, %c0_51], %73 {strides = array<i32>} : memref<64x128xf32, #tpu.memory_space<vmem>>, vector<8x128xf32>,
    %c56_52 = arith.constant 56 : index
    %c0_53 = arith.constant 0 : index
    %75 = vector.load %arg11[%c56_52, %c0_53] : memref<64x128xf32, #tpu.memory_space<vmem>>, vector<8x128xf32>
    %cst_54 = arith.constant dense<0.000000e+00> : vector<8x128xf32>
    %76 = tpu.matmul %73, %1, %cst_54 {dimension_numbers = #tpu.dot_dimension_numbers<[1], [0], [0], [1], [0, 0, 1, 1], [], []>} : vector<8x128xf32>, vector<128x128xf32>, vector<8x128xf32> -> vector<8x128xf32>
    %77 = arith.addf %75, %76 : vector<8x128xf32>
    %78 = math.tanh %77 : vector<8x128xf32>
    %c56_55 = arith.constant 56 : index
    %c0_56 = arith.constant 0 : index
    %79 = vector.load %arg11[%c56_55, %c0_56] : memref<64x128xf32, #tpu.memory_space<vmem>>, vector<8x128xf32>
    tpu.vector_store %arg11[%c56_55, %c0_56], %78 {strides = array<i32>} : memref<64x128xf32, #tpu.memory_space<vmem>>, vector<8x128xf32>,
    %c0_57 = arith.constant 0 : index
    %c0_58 = arith.constant 0 : index
    %80 = vector.load %arg4[%c0_57, %c0_58] : memref<128x128xf32, #tpu.memory_space<vmem>>, vector<128x128xf32>
    %c0_59 = arith.constant 0 : index
    %c0_60 = arith.constant 0 : index
    %81 = vector.load %arg5[%c0_59, %c0_60] : memref<128x128xf32, #tpu.memory_space<vmem>>, vector<128x128xf32>
    %c0_61 = arith.constant 0 : index
    %c0_62 = arith.constant 0 : index
    %82 = vector.load %arg6[%c0_61, %c0_62] : memref<1x128xf32, #tpu.memory_space<vmem>>, vector<1x128xf32>
    %c0_63 = arith.constant 0 : index
    %c0_64 = arith.constant 0 : index
    %83 = vector.load %arg11[%c0_63, %c0_64] : memref<64x128xf32, #tpu.memory_space<vmem>>, vector<8x128xf32>
    %c56_65 = arith.constant 56 : index
    %c0_66 = arith.constant 0 : index
    %84 = vector.load %arg11[%c56_65, %c0_66] : memref<64x128xf32, #tpu.memory_space<vmem>>, vector<8x128xf32>
    %85 = vector.extract_strided_slice %83 {offsets = [0, 0], sizes = [8, 64], strides = [1, 1]} : vector<8x128xf32> to vector<8x64xf32>
    %86 = vector.extract_strided_slice %84 {offsets = [0, 64], sizes = [8, 64], strides = [1, 1]} : vector<8x128xf32> to vector<8x64xf32>
    %87 = tpu.concatenate %85, %86 in 1 : vector<8x64xf32>, vector<8x64xf32> -> vector<8x128xf32>
    %c8_67 = arith.constant 8 : index
    %c0_68 = arith.constant 0 : index
    %88 = vector.load %arg11[%c8_67, %c0_68] : memref<64x128xf32, #tpu.memory_space<vmem>>, vector<8x128xf32>
    %c48_69 = arith.constant 48 : index
    %c0_70 = arith.constant 0 : index
    %89 = vector.load %arg11[%c48_69, %c0_70] : memref<64x128xf32, #tpu.memory_space<vmem>>, vector<8x128xf32>
    %90 = vector.extract_strided_slice %88 {offsets = [0, 0], sizes = [8, 64], strides = [1, 1]} : vector<8x128xf32> to vector<8x64xf32>
    %91 = vector.extract_strided_slice %89 {offsets = [0, 64], sizes = [8, 64], strides = [1, 1]} : vector<8x128xf32> to vector<8x64xf32>
    %92 = tpu.concatenate %90, %91 in 1 : vector<8x64xf32>, vector<8x64xf32> -> vector<8x128xf32>
    %c16_71 = arith.constant 16 : index
    %c0_72 = arith.constant 0 : index
    %93 = vector.load %arg11[%c16_71, %c0_72] : memref<64x128xf32, #tpu.memory_space<vmem>>, vector<8x128xf32>
    %c40_73 = arith.constant 40 : index
    %c0_74 = arith.constant 0 : index
    %94 = vector.load %arg11[%c40_73, %c0_74] : memref<64x128xf32, #tpu.memory_space<vmem>>, vector<8x128xf32>
    %95 = vector.extract_strided_slice %93 {offsets = [0, 0], sizes = [8, 64], strides = [1, 1]} : vector<8x128xf32> to vector<8x64xf32>
    %96 = vector.extract_strided_slice %94 {offsets = [0, 64], sizes = [8, 64], strides = [1, 1]} : vector<8x128xf32> to vector<8x64xf32>
    %97 = tpu.concatenate %95, %96 in 1 : vector<8x64xf32>, vector<8x64xf32> -> vector<8x128xf32>
    %c24_75 = arith.constant 24 : index
    %c0_76 = arith.constant 0 : index
    %98 = vector.load %arg11[%c24_75, %c0_76] : memref<64x128xf32, #tpu.memory_space<vmem>>, vector<8x128xf32>
    %c32_77 = arith.constant 32 : index
    %c0_78 = arith.constant 0 : index
    %99 = vector.load %arg11[%c32_77, %c0_78] : memref<64x128xf32, #tpu.memory_space<vmem>>, vector<8x128xf32>
    %100 = vector.extract_strided_slice %98 {offsets = [0, 0], sizes = [8, 64], strides = [1, 1]} : vector<8x128xf32> to vector<8x64xf32>
    %101 = vector.extract_strided_slice %99 {offsets = [0, 64], sizes = [8, 64], strides = [1, 1]} : vector<8x128xf32> to vector<8x64xf32>
    %102 = tpu.concatenate %100, %101 in 1 : vector<8x64xf32>, vector<8x64xf32> -> vector<8x128xf32>
    %c32_79 = arith.constant 32 : index
    %c0_80 = arith.constant 0 : index
    %103 = vector.load %arg11[%c32_79, %c0_80] : memref<64x128xf32, #tpu.memory_space<vmem>>, vector<8x128xf32>
    %c24_81 = arith.constant 24 : index
    %c0_82 = arith.constant 0 : index
    %104 = vector.load %arg11[%c24_81, %c0_82] : memref<64x128xf32, #tpu.memory_space<vmem>>, vector<8x128xf32>
    %105 = vector.extract_strided_slice %103 {offsets = [0, 0], sizes = [8, 64], strides = [1, 1]} : vector<8x128xf32> to vector<8x64xf32>
    %106 = vector.extract_strided_slice %104 {offsets = [0, 64], sizes = [8, 64], strides = [1, 1]} : vector<8x128xf32> to vector<8x64xf32>
    %107 = tpu.concatenate %105, %106 in 1 : vector<8x64xf32>, vector<8x64xf32> -> vector<8x128xf32>
    %c40_83 = arith.constant 40 : index
    %c0_84 = arith.constant 0 : index
    %108 = vector.load %arg11[%c40_83, %c0_84] : memref<64x128xf32, #tpu.memory_space<vmem>>, vector<8x128xf32>
    %c16_85 = arith.constant 16 : index
    %c0_86 = arith.constant 0 : index
    %109 = vector.load %arg11[%c16_85, %c0_86] : memref<64x128xf32, #tpu.memory_space<vmem>>, vector<8x128xf32>
    %110 = vector.extract_strided_slice %108 {offsets = [0, 0], sizes = [8, 64], strides = [1, 1]} : vector<8x128xf32> to vector<8x64xf32>
    %111 = vector.extract_strided_slice %109 {offsets = [0, 64], sizes = [8, 64], strides = [1, 1]} : vector<8x128xf32> to vector<8x64xf32>
    %112 = tpu.concatenate %110, %111 in 1 : vector<8x64xf32>, vector<8x64xf32> -> vector<8x128xf32>
    %c48_87 = arith.constant 48 : index
    %c0_88 = arith.constant 0 : index
    %113 = vector.load %arg11[%c48_87, %c0_88] : memref<64x128xf32, #tpu.memory_space<vmem>>, vector<8x128xf32>
    %c8_89 = arith.constant 8 : index
    %c0_90 = arith.constant 0 : index
    %114 = vector.load %arg11[%c8_89, %c0_90] : memref<64x128xf32, #tpu.memory_space<vmem>>, vector<8x128xf32>
    %115 = vector.extract_strided_slice %113 {offsets = [0, 0], sizes = [8, 64], strides = [1, 1]} : vector<8x128xf32> to vector<8x64xf32>
    %116 = vector.extract_strided_slice %114 {offsets = [0, 64], sizes = [8, 64], strides = [1, 1]} : vector<8x128xf32> to vector<8x64xf32>
    %117 = tpu.concatenate %115, %116 in 1 : vector<8x64xf32>, vector<8x64xf32> -> vector<8x128xf32>
    %c56_91 = arith.constant 56 : index
    %c0_92 = arith.constant 0 : index
    %118 = vector.load %arg11[%c56_91, %c0_92] : memref<64x128xf32, #tpu.memory_space<vmem>>, vector<8x128xf32>
    %c0_93 = arith.constant 0 : index
    %c0_94 = arith.constant 0 : index
    %119 = vector.load %arg11[%c0_93, %c0_94] : memref<64x128xf32, #tpu.memory_space<vmem>>, vector<8x128xf32>
    %120 = vector.extract_strided_slice %118 {offsets = [0, 0], sizes = [8, 64], strides = [1, 1]} : vector<8x128xf32> to vector<8x64xf32>
    %121 = vector.extract_strided_slice %119 {offsets = [0, 64], sizes = [8, 64], strides = [1, 1]} : vector<8x128xf32> to vector<8x64xf32>
    %122 = tpu.concatenate %120, %121 in 1 : vector<8x64xf32>, vector<8x64xf32> -> vector<8x128xf32>
    %123 = tpu.concatenate %87, %92, %97, %102, %107, %112, %117, %122 in 0 : vector<8x128xf32>, vector<8x128xf32>, vector<8x128xf32>, vector<8x128xf32>, vector<8x128xf32>, vector<8x128xf32>, vector<8x128xf32>, vector<8x128xf32> -> vector<64x128xf32>
    %cst_95 = arith.constant dense<0.000000e+00> : vector<64x128xf32>
    %124 = tpu.matmul %123, %80, %cst_95 {dimension_numbers = #tpu.dot_dimension_numbers<[1], [0], [0], [1], [0, 0, 1, 1], [], []>} : vector<64x128xf32>, vector<128x128xf32>, vector<64x128xf32> -> vector<64x128xf32>
    %125 = vector.broadcast %82 : vector<1x128xf32> to vector<64x128xf32>
    %126 = arith.addf %124, %125 : vector<64x128xf32>
    %127 = vector.extract_strided_slice %126 {offsets = [0, 0], sizes = [8, 64], strides = [1, 1]} : vector<64x128xf32> to vector<8x64xf32>
    %128 = vector.extract_strided_slice %126 {offsets = [56, 64], sizes = [8, 64], strides = [1, 1]} : vector<64x128xf32> to vector<8x64xf32>
    %129 = tpu.concatenate %127, %128 in 1 : vector<8x64xf32>, vector<8x64xf32> -> vector<8x128xf32>
    %c0_96 = arith.constant 0 : index
    %c0_97 = arith.constant 0 : index
    %130 = vector.load %arg12[%c0_96, %c0_97] : memref<64x128xf32, #tpu.memory_space<vmem>>, vector<8x128xf32>
    tpu.vector_store %arg12[%c0_96, %c0_97], %129 {strides = array<i32>} : memref<64x128xf32, #tpu.memory_space<vmem>>, vector<8x128xf32>,
    %131 = vector.extract_strided_slice %126 {offsets = [8, 0], sizes = [8, 64], strides = [1, 1]} : vector<64x128xf32> to vector<8x64xf32>
    %132 = vector.extract_strided_slice %126 {offsets = [48, 64], sizes = [8, 64], strides = [1, 1]} : vector<64x128xf32> to vector<8x64xf32>
    %133 = tpu.concatenate %131, %132 in 1 : vector<8x64xf32>, vector<8x64xf32> -> vector<8x128xf32>
    %c8_98 = arith.constant 8 : index
    %c0_99 = arith.constant 0 : index
    %134 = vector.load %arg12[%c8_98, %c0_99] : memref<64x128xf32, #tpu.memory_space<vmem>>, vector<8x128xf32>
    tpu.vector_store %arg12[%c8_98, %c0_99], %133 {strides = array<i32>} : memref<64x128xf32, #tpu.memory_space<vmem>>, vector<8x128xf32>,
    %135 = vector.extract_strided_slice %126 {offsets = [16, 0], sizes = [8, 64], strides = [1, 1]} : vector<64x128xf32> to vector<8x64xf32>
    %136 = vector.extract_strided_slice %126 {offsets = [40, 64], sizes = [8, 64], strides = [1, 1]} : vector<64x128xf32> to vector<8x64xf32>
    %137 = tpu.concatenate %135, %136 in 1 : vector<8x64xf32>, vector<8x64xf32> -> vector<8x128xf32>
    %c16_100 = arith.constant 16 : index
    %c0_101 = arith.constant 0 : index
    %138 = vector.load %arg12[%c16_100, %c0_101] : memref<64x128xf32, #tpu.memory_space<vmem>>, vector<8x128xf32>
    tpu.vector_store %arg12[%c16_100, %c0_101], %137 {strides = array<i32>} : memref<64x128xf32, #tpu.memory_space<vmem>>, vector<8x128xf32>,
    %139 = vector.extract_strided_slice %126 {offsets = [24, 0], sizes = [8, 64], strides = [1, 1]} : vector<64x128xf32> to vector<8x64xf32>
    %140 = vector.extract_strided_slice %126 {offsets = [32, 64], sizes = [8, 64], strides = [1, 1]} : vector<64x128xf32> to vector<8x64xf32>
    %141 = tpu.concatenate %139, %140 in 1 : vector<8x64xf32>, vector<8x64xf32> -> vector<8x128xf32>
    %c24_102 = arith.constant 24 : index
    %c0_103 = arith.constant 0 : index
    %142 = vector.load %arg12[%c24_102, %c0_103] : memref<64x128xf32, #tpu.memory_space<vmem>>, vector<8x128xf32>
    tpu.vector_store %arg12[%c24_102, %c0_103], %141 {strides = array<i32>} : memref<64x128xf32, #tpu.memory_space<vmem>>, vector<8x128xf32>,
    %143 = vector.extract_strided_slice %126 {offsets = [32, 0], sizes = [8, 64], strides = [1, 1]} : vector<64x128xf32> to vector<8x64xf32>
    %144 = vector.extract_strided_slice %126 {offsets = [24, 64], sizes = [8, 64], strides = [1, 1]} : vector<64x128xf32> to vector<8x64xf32>
    %145 = tpu.concatenate %143, %144 in 1 : vector<8x64xf32>, vector<8x64xf32> -> vector<8x128xf32>
    %c32_104 = arith.constant 32 : index
    %c0_105 = arith.constant 0 : index
    %146 = vector.load %arg12[%c32_104, %c0_105] : memref<64x128xf32, #tpu.memory_space<vmem>>, vector<8x128xf32>
    tpu.vector_store %arg12[%c32_104, %c0_105], %145 {strides = array<i32>} : memref<64x128xf32, #tpu.memory_space<vmem>>, vector<8x128xf32>,
    %147 = vector.extract_strided_slice %126 {offsets = [40, 0], sizes = [8, 64], strides = [1, 1]} : vector<64x128xf32> to vector<8x64xf32>
    %148 = vector.extract_strided_slice %126 {offsets = [16, 64], sizes = [8, 64], strides = [1, 1]} : vector<64x128xf32> to vector<8x64xf32>
    %149 = tpu.concatenate %147, %148 in 1 : vector<8x64xf32>, vector<8x64xf32> -> vector<8x128xf32>
    %c40_106 = arith.constant 40 : index
    %c0_107 = arith.constant 0 : index
    %150 = vector.load %arg12[%c40_106, %c0_107] : memref<64x128xf32, #tpu.memory_space<vmem>>, vector<8x128xf32>
    tpu.vector_store %arg12[%c40_106, %c0_107], %149 {strides = array<i32>} : memref<64x128xf32, #tpu.memory_space<vmem>>, vector<8x128xf32>,
    %151 = vector.extract_strided_slice %126 {offsets = [48, 0], sizes = [8, 64], strides = [1, 1]} : vector<64x128xf32> to vector<8x64xf32>
    %152 = vector.extract_strided_slice %126 {offsets = [8, 64], sizes = [8, 64], strides = [1, 1]} : vector<64x128xf32> to vector<8x64xf32>
    %153 = tpu.concatenate %151, %152 in 1 : vector<8x64xf32>, vector<8x64xf32> -> vector<8x128xf32>
    %c48_108 = arith.constant 48 : index
    %c0_109 = arith.constant 0 : index
    %154 = vector.load %arg12[%c48_108, %c0_109] : memref<64x128xf32, #tpu.memory_space<vmem>>, vector<8x128xf32>
    tpu.vector_store %arg12[%c48_108, %c0_109], %153 {strides = array<i32>} : memref<64x128xf32, #tpu.memory_space<vmem>>, vector<8x128xf32>,
    %155 = vector.extract_strided_slice %126 {offsets = [56, 0], sizes = [8, 64], strides = [1, 1]} : vector<64x128xf32> to vector<8x64xf32>
    %156 = vector.extract_strided_slice %126 {offsets = [0, 64], sizes = [8, 64], strides = [1, 1]} : vector<64x128xf32> to vector<8x64xf32>
    %157 = tpu.concatenate %155, %156 in 1 : vector<8x64xf32>, vector<8x64xf32> -> vector<8x128xf32>
    %c56_110 = arith.constant 56 : index
    %c0_111 = arith.constant 0 : index
    %158 = vector.load %arg12[%c56_110, %c0_111] : memref<64x128xf32, #tpu.memory_space<vmem>>, vector<8x128xf32>
    tpu.vector_store %arg12[%c56_110, %c0_111], %157 {strides = array<i32>} : memref<64x128xf32, #tpu.memory_space<vmem>>, vector<8x128xf32>,
    %cst_112 = arith.constant 0.000000e+00 : f32
    %159 = vector.broadcast %cst_112 : f32 to vector<8x128xf32>
    %c0_113 = arith.constant 0 : index
    %c0_114 = arith.constant 0 : index
    %160 = vector.load %arg12[%c0_113, %c0_114] : memref<64x128xf32, #tpu.memory_space<vmem>>, vector<8x128xf32>
    %cst_115 = arith.constant dense<0.000000e+00> : vector<8x128xf32>
    %161 = tpu.matmul %159, %81, %cst_115 {dimension_numbers = #tpu.dot_dimension_numbers<[1], [0], [0], [1], [0, 0, 1, 1], [], []>} : vector<8x128xf32>, vector<128x128xf32>, vector<8x128xf32> -> vector<8x128xf32>
    %162 = arith.addf %160, %161 : vector<8x128xf32>
    %163 = math.tanh %162 : vector<8x128xf32>
    %c0_116 = arith.constant 0 : index
    %c0_117 = arith.constant 0 : index
    %164 = vector.load %arg12[%c0_116, %c0_117] : memref<64x128xf32, #tpu.memory_space<vmem>>, vector<8x128xf32>
    tpu.vector_store %arg12[%c0_116, %c0_117], %163 {strides = array<i32>} : memref<64x128xf32, #tpu.memory_space<vmem>>, vector<8x128xf32>,
    %c8_118 = arith.constant 8 : index
    %c0_119 = arith.constant 0 : index
    %165 = vector.load %arg12[%c8_118, %c0_119] : memref<64x128xf32, #tpu.memory_space<vmem>>, vector<8x128xf32>
    %cst_120 = arith.constant dense<0.000000e+00> : vector<8x128xf32>
    %166 = tpu.matmul %163, %81, %cst_120 {dimension_numbers = #tpu.dot_dimension_numbers<[1], [0], [0], [1], [0, 0, 1, 1], [], []>} : vector<8x128xf32>, vector<128x128xf32>, vector<8x128xf32> -> vector<8x128xf32>
    %167 = arith.addf %165, %166 : vector<8x128xf32>
    %168 = math.tanh %167 : vector<8x128xf32>
    %c8_121 = arith.constant 8 : index
    %c0_122 = arith.constant 0 : index
    %169 = vector.load %arg12[%c8_121, %c0_122] : memref<64x128xf32, #tpu.memory_space<vmem>>, vector<8x128xf32>
    tpu.vector_store %arg12[%c8_121, %c0_122], %168 {strides = array<i32>} : memref<64x128xf32, #tpu.memory_space<vmem>>, vector<8x128xf32>,
    %c16_123 = arith.constant 16 : index
    %c0_124 = arith.constant 0 : index
    %170 = vector.load %arg12[%c16_123, %c0_124] : memref<64x128xf32, #tpu.memory_space<vmem>>, vector<8x128xf32>
    %cst_125 = arith.constant dense<0.000000e+00> : vector<8x128xf32>
    %171 = tpu.matmul %168, %81, %cst_125 {dimension_numbers = #tpu.dot_dimension_numbers<[1], [0], [0], [1], [0, 0, 1, 1], [], []>} : vector<8x128xf32>, vector<128x128xf32>, vector<8x128xf32> -> vector<8x128xf32>
    %172 = arith.addf %170, %171 : vector<8x128xf32>
    %173 = math.tanh %172 : vector<8x128xf32>
    %c16_126 = arith.constant 16 : index
    %c0_127 = arith.constant 0 : index
    %174 = vector.load %arg12[%c16_126, %c0_127] : memref<64x128xf32, #tpu.memory_space<vmem>>, vector<8x128xf32>
    tpu.vector_store %arg12[%c16_126, %c0_127], %173 {strides = array<i32>} : memref<64x128xf32, #tpu.memory_space<vmem>>, vector<8x128xf32>,
    %c24_128 = arith.constant 24 : index
    %c0_129 = arith.constant 0 : index
    %175 = vector.load %arg12[%c24_128, %c0_129] : memref<64x128xf32, #tpu.memory_space<vmem>>, vector<8x128xf32>
    %cst_130 = arith.constant dense<0.000000e+00> : vector<8x128xf32>
    %176 = tpu.matmul %173, %81, %cst_130 {dimension_numbers = #tpu.dot_dimension_numbers<[1], [0], [0], [1], [0, 0, 1, 1], [], []>} : vector<8x128xf32>, vector<128x128xf32>, vector<8x128xf32> -> vector<8x128xf32>
    %177 = arith.addf %175, %176 : vector<8x128xf32>
    %178 = math.tanh %177 : vector<8x128xf32>
    %c24_131 = arith.constant 24 : index
    %c0_132 = arith.constant 0 : index
    %179 = vector.load %arg12[%c24_131, %c0_132] : memref<64x128xf32, #tpu.memory_space<vmem>>, vector<8x128xf32>
    tpu.vector_store %arg12[%c24_131, %c0_132], %178 {strides = array<i32>} : memref<64x128xf32, #tpu.memory_space<vmem>>, vector<8x128xf32>,
    %c32_133 = arith.constant 32 : index
    %c0_134 = arith.constant 0 : index
    %180 = vector.load %arg12[%c32_133, %c0_134] : memref<64x128xf32, #tpu.memory_space<vmem>>, vector<8x128xf32>
    %cst_135 = arith.constant dense<0.000000e+00> : vector<8x128xf32>
    %181 = tpu.matmul %178, %81, %cst_135 {dimension_numbers = #tpu.dot_dimension_numbers<[1], [0], [0], [1], [0, 0, 1, 1], [], []>} : vector<8x128xf32>, vector<128x128xf32>, vector<8x128xf32> -> vector<8x128xf32>
    %182 = arith.addf %180, %181 : vector<8x128xf32>
    %183 = math.tanh %182 : vector<8x128xf32>
    %c32_136 = arith.constant 32 : index
    %c0_137 = arith.constant 0 : index
    %184 = vector.load %arg12[%c32_136, %c0_137] : memref<64x128xf32, #tpu.memory_space<vmem>>, vector<8x128xf32>
    tpu.vector_store %arg12[%c32_136, %c0_137], %183 {strides = array<i32>} : memref<64x128xf32, #tpu.memory_space<vmem>>, vector<8x128xf32>,
    %c40_138 = arith.constant 40 : index
    %c0_139 = arith.constant 0 : index
    %185 = vector.load %arg12[%c40_138, %c0_139] : memref<64x128xf32, #tpu.memory_space<vmem>>, vector<8x128xf32>
    %cst_140 = arith.constant dense<0.000000e+00> : vector<8x128xf32>
    %186 = tpu.matmul %183, %81, %cst_140 {dimension_numbers = #tpu.dot_dimension_numbers<[1], [0], [0], [1], [0, 0, 1, 1], [], []>} : vector<8x128xf32>, vector<128x128xf32>, vector<8x128xf32> -> vector<8x128xf32>
    %187 = arith.addf %185, %186 : vector<8x128xf32>
    %188 = math.tanh %187 : vector<8x128xf32>
    %c40_141 = arith.constant 40 : index
    %c0_142 = arith.constant 0 : index
    %189 = vector.load %arg12[%c40_141, %c0_142] : memref<64x128xf32, #tpu.memory_space<vmem>>, vector<8x128xf32>
    tpu.vector_store %arg12[%c40_141, %c0_142], %188 {strides = array<i32>} : memref<64x128xf32, #tpu.memory_space<vmem>>, vector<8x128xf32>,
    %c48_143 = arith.constant 48 : index
    %c0_144 = arith.constant 0 : index
    %190 = vector.load %arg12[%c48_143, %c0_144] : memref<64x128xf32, #tpu.memory_space<vmem>>, vector<8x128xf32>
    %cst_145 = arith.constant dense<0.000000e+00> : vector<8x128xf32>
    %191 = tpu.matmul %188, %81, %cst_145 {dimension_numbers = #tpu.dot_dimension_numbers<[1], [0], [0], [1], [0, 0, 1, 1], [], []>} : vector<8x128xf32>, vector<128x128xf32>, vector<8x128xf32> -> vector<8x128xf32>
    %192 = arith.addf %190, %191 : vector<8x128xf32>
    %193 = math.tanh %192 : vector<8x128xf32>
    %c48_146 = arith.constant 48 : index
    %c0_147 = arith.constant 0 : index
    %194 = vector.load %arg12[%c48_146, %c0_147] : memref<64x128xf32, #tpu.memory_space<vmem>>, vector<8x128xf32>
    tpu.vector_store %arg12[%c48_146, %c0_147], %193 {strides = array<i32>} : memref<64x128xf32, #tpu.memory_space<vmem>>, vector<8x128xf32>,
    %c56_148 = arith.constant 56 : index
    %c0_149 = arith.constant 0 : index
    %195 = vector.load %arg12[%c56_148, %c0_149] : memref<64x128xf32, #tpu.memory_space<vmem>>, vector<8x128xf32>
    %cst_150 = arith.constant dense<0.000000e+00> : vector<8x128xf32>
    %196 = tpu.matmul %193, %81, %cst_150 {dimension_numbers = #tpu.dot_dimension_numbers<[1], [0], [0], [1], [0, 0, 1, 1], [], []>} : vector<8x128xf32>, vector<128x128xf32>, vector<8x128xf32> -> vector<8x128xf32>
    %197 = arith.addf %195, %196 : vector<8x128xf32>
    %198 = math.tanh %197 : vector<8x128xf32>
    %c56_151 = arith.constant 56 : index
    %c0_152 = arith.constant 0 : index
    %199 = vector.load %arg12[%c56_151, %c0_152] : memref<64x128xf32, #tpu.memory_space<vmem>>, vector<8x128xf32>
    tpu.vector_store %arg12[%c56_151, %c0_152], %198 {strides = array<i32>} : memref<64x128xf32, #tpu.memory_space<vmem>>, vector<8x128xf32>,
    %200 = vector.extract_strided_slice %198 {offsets = [0, 0], sizes = [8, 64], strides = [1, 1]} : vector<8x128xf32> to vector<8x64xf32>
    %c0_153 = arith.constant 0 : index
    %c0_154 = arith.constant 0 : index
    %201 = vector.load %arg12[%c0_153, %c0_154] : memref<64x128xf32, #tpu.memory_space<vmem>>, vector<8x128xf32>
    %202 = vector.extract_strided_slice %201 {offsets = [0, 64], sizes = [8, 64], strides = [1, 1]} : vector<8x128xf32> to vector<8x64xf32>
    %c0_155 = arith.constant 0 : index
    %c0_156 = arith.constant 0 : index
    %203 = vector.load %arg7[%c0_155, %c0_156] : memref<64x128xf32, #tpu.memory_space<vmem>>, vector<64x128xf32>
    %cst_157 = arith.constant dense<0.000000e+00> : vector<8x128xf32>
    %204 = tpu.matmul %200, %203, %cst_157 {dimension_numbers = #tpu.dot_dimension_numbers<[1], [0], [0], [1], [0, 0, 1, 1], [], []>} : vector<8x64xf32>, vector<64x128xf32>, vector<8x128xf32> -> vector<8x128xf32>
    %c0_158 = arith.constant 0 : index
    %c0_159 = arith.constant 0 : index
    %205 = vector.load %arg8[%c0_158, %c0_159] : memref<64x128xf32, #tpu.memory_space<vmem>>, vector<64x128xf32>
    %cst_160 = arith.constant dense<0.000000e+00> : vector<8x128xf32>
    %206 = tpu.matmul %202, %205, %cst_160 {dimension_numbers = #tpu.dot_dimension_numbers<[1], [0], [0], [1], [0, 0, 1, 1], [], []>} : vector<8x64xf32>, vector<64x128xf32>, vector<8x128xf32> -> vector<8x128xf32>
    %207 = arith.addf %204, %206 : vector<8x128xf32>
    %c0_161 = arith.constant 0 : index
    %c0_162 = arith.constant 0 : index
    %208 = vector.load %arg9[%c0_161, %c0_162] : memref<1x128xf32, #tpu.memory_space<vmem>>, vector<1x128xf32>
    %209 = vector.broadcast %208 : vector<1x128xf32> to vector<8x128xf32>
    %210 = arith.addf %207, %209 : vector<8x128xf32>
    %c0_163 = arith.constant 0 : index
    %c0_164 = arith.constant 0 : index
    %211 = vector.load %arg10[%c0_163, %c0_164] : memref<8x128xf32, #tpu.memory_space<vmem>>, vector<8x128xf32>
    tpu.vector_store %arg10[%c0_163, %c0_164], %210 {strides = array<i32>} : memref<8x128xf32, #tpu.memory_space<vmem>>, vector<8x128xf32>,
    return
  }
}

</mosaic_0001>

<llo_original>
// kernel: birnn_forward.1
$region0: #{birnn_forward.1}
  #allocation0 [shape = 'u32[]', space=smem, size = 0x4, offset = 0x4, fixed_abs, tag = 'smem constant byte address 0x4 - core index']
  #allocation1 [shape = 'u32[72,128]{1,0:T(1,128)}', space=vmem, size = 0x9000, scoped, tag = 'internal scratch']
  #allocation2 [shape = 'f32[64,128]{1,0:T(8,128)}', space=vmem, size = 0x8000, scoped, tag = 'scratch operand']
  #allocation3 [shape = 'f32[64,128]{1,0:T(8,128)}', space=vmem, size = 0x8000, scoped, tag = 'scratch operand']
  %s0 = inlined_call_operand.vmem [shape: f32[64,16], index: 0, kind: input, shape index: {}]
  %s1 = inlined_call_operand.vmem [shape: f32[16,128], index: 1, kind: input, shape index: {}]
  %s2 = inlined_call_operand.vmem [shape: f32[128,128], index: 2, kind: input, shape index: {}]
  %s3 = inlined_call_operand.vmem [shape: f32[1,128], index: 3, kind: input, shape index: {}]
  %s4 = inlined_call_operand.vmem [shape: f32[128,128], index: 4, kind: input, shape index: {}]
  %s5 = inlined_call_operand.vmem [shape: f32[128,128], index: 5, kind: input, shape index: {}]
  %s6 = inlined_call_operand.vmem [shape: f32[1,128], index: 6, kind: input, shape index: {}]
  %s7 = inlined_call_operand.vmem [shape: f32[64,128], index: 7, kind: input, shape index: {}]
  %s8 = inlined_call_operand.vmem [shape: f32[64,128], index: 8, kind: input, shape index: {}]
  %s9 = inlined_call_operand.vmem [shape: f32[1,128], index: 9, kind: input, shape index: {}]
  %s10 = inlined_call_operand.vmem [shape: f32[8,128], index: 10, kind: output, shape index: {}]
  %s11 = sld [smem:[#allocation0]]
  $region50: #{birnn_forward.1} parent=0
    _
  %s13 = ssub.s32 1, %s11
  %s14 = scalar_select 0, %s13, %s11
  // Predicated region
  $region2: #{birnn_forward.1} parent=0 // pred_check
    _
  $region3: #{birnn_forward.1} parent=0 // pred_check_branch
    %16 = sbr.rel (0) target = $region5
  $region4: #{birnn_forward.1} parent=0 // pred_region
    _
  $region5: #{birnn_forward.1} parent=0 // pred_fallthru
    _
  // Predicated region
  $region6: #{birnn_forward.1} parent=0 // pred_check
    _
  $region7: #{birnn_forward.1} parent=0 // pred_check_branch
    %18 = sbr.rel (0) target = $region9
  $region8: #{birnn_forward.1} parent=0 // pred_region
    _
  $region9: #{birnn_forward.1} parent=0 // pred_fallthru
    _
  // Predicated region
  $region10: #{birnn_forward.1} parent=0 // pred_check
    _
  $region11: #{birnn_forward.1} parent=0 // pred_check_branch
    %20 = sbr.rel (0) target = $region13
  $region12: #{birnn_forward.1} parent=0 // pred_region
    _
  $region13: #{birnn_forward.1} parent=0 // pred_fallthru
    _
  // Predicated region
  $region14: #{birnn_forward.1} parent=0 // pred_check
    _
  $region15: #{birnn_forward.1} parent=0 // pred_check_branch
    %22 = sbr.rel (0) target = $region17
  $region16: #{birnn_forward.1} parent=0 // pred_region
    _
  $region17: #{birnn_forward.1} parent=0 // pred_fallthru
    _
  // Predicated region
  $region18: #{birnn_forward.1} parent=0 // pred_check
    _
  $region19: #{birnn_forward.1} parent=0 // pred_check_branch
    %24 = sbr.rel (0) target = $region21
  $region20: #{birnn_forward.1} parent=0 // pred_region
    _
  $region21: #{birnn_forward.1} parent=0 // pred_fallthru
    _
  // Predicated region
  $region22: #{birnn_forward.1} parent=0 // pred_check
    _
  $region23: #{birnn_forward.1} parent=0 // pred_check_branch
    %26 = sbr.rel (0) target = $region25
  $region24: #{birnn_forward.1} parent=0 // pred_region
    _
  $region25: #{birnn_forward.1} parent=0 // pred_fallthru
    _
  // Predicated region
  $region26: #{birnn_forward.1} parent=0 // pred_check
    _
  $region27: #{birnn_forward.1} parent=0 // pred_check_branch
    %28 = sbr.rel (0) target = $region29
  $region28: #{birnn_forward.1} parent=0 // pred_region
    _
  $region29: #{birnn_forward.1} parent=0 // pred_fallthru
    _
  // Predicated region
  $region30: #{birnn_forward.1} parent=0 // pred_check
    _
  $region31: #{birnn_forward.1} parent=0 // pred_check_branch
    %30 = sbr.rel (0) target = $region33
  $region32: #{birnn_forward.1} parent=0 // pred_region
    _
  $region33: #{birnn_forward.1} parent=0 // pred_fallthru
    _
  // Predicated region
  $region34: #{birnn_forward.1} parent=0 // pred_check
    _
  $region35: #{birnn_forward.1} parent=0 // pred_check_branch
    %32 = sbr.rel (0) target = $region37
  $region36: #{birnn_forward.1} parent=0 // pred_region
    _
  $region37: #{birnn_forward.1} parent=0 // pred_fallthru
    _
  // Predicated region
  $region38: #{birnn_forward.1} parent=0 // pred_check
    _
  $region39: #{birnn_forward.1} parent=0 // pred_check_branch
    %34 = sbr.rel (0) target = $region41
  $region40: #{birnn_forward.1} parent=0 // pred_region
    _
  $region41: #{birnn_forward.1} parent=0 // pred_fallthru
    _
  %v35 = vld [vmem:[%s1] sm:$0xff]
  %v36 = vld [vmem:[%s1 + $0x8] sm:$0xff]
  %v37 = vld [vmem:[%s2] sm:$0xff]
  %v38 = vld [vmem:[%s2 + $0x8] sm:$0xff]
  %v39 = vld [vmem:[%s2 + $0x10] sm:$0xff]
  %v40 = vld [vmem:[%s2 + $0x18] sm:$0xff]
  %v41 = vld [vmem:[%s2 + $0x20] sm:$0xff]
  %v42 = vld [vmem:[%s2 + $0x28] sm:$0xff]
  %v43 = vld [vmem:[%s2 + $0x30] sm:$0xff]
  %v44 = vld [vmem:[%s2 + $0x38] sm:$0xff]
  %v45 = vld [vmem:[%s2 + $0x40] sm:$0xff]
  %v46 = vld [vmem:[%s2 + $0x48] sm:$0xff]
  %v47 = vld [vmem:[%s2 + $0x50] sm:$0xff]
  %v48 = vld [vmem:[%s2 + $0x58] sm:$0xff]
  %v49 = vld [vmem:[%s2 + $0x60] sm:$0xff]
  %v50 = vld [vmem:[%s2 + $0x68] sm:$0xff]
  %v51 = vld [vmem:[%s2 + $0x70] sm:$0xff]
  %v52 = vld [vmem:[%s2 + $0x78] sm:$0xff]
  %v53 = vld [vmem:[%s3] sm:$0x1]
  %v54 = vld [vmem:[%s0] sm:$0xff]
  %v55 = vld [vmem:[%s0 + $0x8] sm:$0xff]
  %v56 = vld [vmem:[%s0 + $0x10] sm:$0xff]
  %v57 = vld [vmem:[%s0 + $0x18] sm:$0xff]
  %v58 = vld [vmem:[%s0 + $0x20] sm:$0xff]
  %v59 = vld [vmem:[%s0 + $0x28] sm:$0xff]
  %v60 = vld [vmem:[%s0 + $0x30] sm:$0xff]
  %v61 = vld [vmem:[%s0 + $0x38] sm:$0xff]
  %v63 = vperm.slane %v53, 0
  %vm65 = vcmask 130048
  %v67 = vsel %vm65, %v54, 0
  %v70 = vsel %vm65, %v55, 0
  %v73 = vsel %vm65, %v56, 0
  %v76 = vsel %vm65, %v57, 0
  %v79 = vsel %vm65, %v58, 0
  %v82 = vsel %vm65, %v59, 0
  %v85 = vsel %vm65, %v60, 0
  %v88 = vsel %vm65, %v61, 0
  %90 = vmatpush.msra.mxu0 0.0
  %91 = vmatpush.msra.mxu0 0.0
  %92 = vmatpush.msra.mxu0 0.0
  %93 = vmatpush.msra.mxu0 0.0
  %94 = vmatpush.msra.mxu0 0.0
  %95 = vmatpush.msra.mxu0 0.0
  %96 = vmatpush.msra.mxu0 0.0
  %97 = vmatpush.msra.mxu0 0.0
  %98 = vmatpush.msra.mxu0 0.0
  %99 = vmatpush.msra.mxu0 0.0
  %100 = vmatpush.msra.mxu0 0.0
  %101 = vmatpush.msra.mxu0 0.0
  %102 = vmatpush.msra.mxu0 0.0
  %103 = vmatpush.msra.mxu0 0.0
  %104 = vmatpush.msra.mxu0 %v36
  %105 = vmatpush.msra.mxu0 %v35
  %106 = vmatmul.f32.gmra.mxu0 %v67
  %v107 = vpop.f32.mrf.mxu0
  %v108 = vadd.f32 %v63, %v107
  %109 = vmatmul.f32.gmra.mxu0 %v70
  %v110 = vpop.f32.mrf.mxu0
  %v111 = vadd.f32 %v63, %v110
  %112 = vmatmul.f32.gmra.mxu0 %v73
  %v113 = vpop.f32.mrf.mxu0
  %v114 = vadd.f32 %v63, %v113
  %115 = vmatmul.f32.gmra.mxu0 %v76
  %v116 = vpop.f32.mrf.mxu0
  %v117 = vadd.f32 %v63, %v116
  %118 = vmatmul.f32.gmra.mxu0 %v79
  %v119 = vpop.f32.mrf.mxu0
  %v120 = vadd.f32 %v63, %v119
  %121 = vmatmul.f32.gmra.mxu0 %v82
  %v122 = vpop.f32.mrf.mxu0
  %v123 = vadd.f32 %v63, %v122
  %124 = vmatmul.f32.gmra.mxu0 %v85
  %v125 = vpop.f32.mrf.mxu0
  %v126 = vadd.f32 %v63, %v125
  %127 = vmatmul.f32.gmra.mxu0 %v88
  %v128 = vpop.f32.mrf.mxu0
  %v129 = vadd.f32 %v63, %v128
  %130 = vdwg.mxu0
  %vm131 = vcmask 523264
  %v132 = vsel %vm131, %v108, %v129
  %133 = vst [vmem:[#allocation2] sm:$0xff] %v132
  %v134 = vsel %vm131, %v111, %v126
  %135 = vst [vmem:[#allocation2 + $0x8] sm:$0xff] %v134
  %v136 = vsel %vm131, %v114, %v123
  %137 = vst [vmem:[#allocation2 + $0x10] sm:$0xff] %v136
  %v138 = vsel %vm131, %v117, %v120
  %139 = vst [vmem:[#allocation2 + $0x18] sm:$0xff] %v138
  %v140 = vsel %vm131, %v120, %v117
  %141 = vst [vmem:[#allocation2 + $0x20] sm:$0xff] %v140
  %v142 = vsel %vm131, %v123, %v114
  %143 = vst [vmem:[#allocation2 + $0x28] sm:$0xff] %v142
  %v144 = vsel %vm131, %v126, %v111
  %145 = vst [vmem:[#allocation2 + $0x30] sm:$0xff] %v144
  %v146 = vsel %vm131, %v129, %v108
  %147 = vst [vmem:[#allocation2 + $0x38] sm:$0xff] %v146
  %v148 = vld [vmem:[#allocation2] sm:$0xff]
  %149 = vmatpush.msra.mxu0 %v52
  %150 = vmatpush.msra.mxu0 %v51
  %151 = vmatpush.msra.mxu0 %v50
  %152 = vmatpush.msra.mxu0 %v49
  %153 = vmatpush.msra.mxu0 %v48
  %154 = vmatpush.msra.mxu0 %v47
  %155 = vmatpush.msra.mxu0 %v46
  %156 = vmatpush.msra.mxu0 %v45
  %157 = vmatpush.msra.mxu0 %v44
  %158 = vmatpush.msra.mxu0 %v43
  %159 = vmatpush.msra.mxu0 %v42
  %160 = vmatpush.msra.mxu0 %v41
  %161 = vmatpush.msra.mxu0 %v40
  %162 = vmatpush.msra.mxu0 %v39
  %163 = vmatpush.msra.mxu0 %v38
  %164 = vmatpush.msra.mxu0 %v37
  %165 = vmatmul.f32.gmra.mxu0 0.0
  %v166 = vpop.f32.mrf.mxu0
  %v167 = vadd.f32 0.0, %v166
  %168 = vdwg.mxu0
  %v169 = vadd.f32 %v148, %v167
  %v170 = vtanh.pop %v169
  %171 = vst [vmem:[#allocation2] sm:$0xff] %v170
  %v172 = vld [vmem:[#allocation2 + $0x8] sm:$0xff]
  %173 = vmatpush.msra.mxu0 %v52
  %174 = vmatpush.msra.mxu0 %v51
  %175 = vmatpush.msra.mxu0 %v50
  %176 = vmatpush.msra.mxu0 %v49
  %177 = vmatpush.msra.mxu0 %v48
  %178 = vmatpush.msra.mxu0 %v47
  %179 = vmatpush.msra.mxu0 %v46
  %180 = vmatpush.msra.mxu0 %v45
  %181 = vmatpush.msra.mxu0 %v44
  %182 = vmatpush.msra.mxu0 %v43
  %183 = vmatpush.msra.mxu0 %v42
  %184 = vmatpush.msra.mxu0 %v41
  %185 = vmatpush.msra.mxu0 %v40
  %186 = vmatpush.msra.mxu0 %v39
  %187 = vmatpush.msra.mxu0 %v38
  %188 = vmatpush.msra.mxu0 %v37
  %189 = vmatmul.f32.gmra.mxu0 %v170
  %v190 = vpop.f32.mrf.mxu0
  %v191 = vadd.f32 0.0, %v190
  %192 = vdwg.mxu0
  %v193 = vadd.f32 %v172, %v191
  %v194 = vtanh.pop %v193
  %195 = vst [vmem:[#allocation2 + $0x8] sm:$0xff] %v194
  %v196 = vld [vmem:[#allocation2 + $0x10] sm:$0xff]
  %197 = vmatpush.msra.mxu0 %v52
  %198 = vmatpush.msra.mxu0 %v51
  %199 = vmatpush.msra.mxu0 %v50
  %200 = vmatpush.msra.mxu0 %v49
  %201 = vmatpush.msra.mxu0 %v48
  %202 = vmatpush.msra.mxu0 %v47
  %203 = vmatpush.msra.mxu0 %v46
  %204 = vmatpush.msra.mxu0 %v45
  %205 = vmatpush.msra.mxu0 %v44
  %206 = vmatpush.msra.mxu0 %v43
  %207 = vmatpush.msra.mxu0 %v42
  %208 = vmatpush.msra.mxu0 %v41
  %209 = vmatpush.msra.mxu0 %v40
  %210 = vmatpush.msra.mxu0 %v39
  %211 = vmatpush.msra.mxu0 %v38
  %212 = vmatpush.msra.mxu0 %v37
  %213 = vmatmul.f32.gmra.mxu0 %v194
  %v214 = vpop.f32.mrf.mxu0
  %v215 = vadd.f32 0.0, %v214
  %216 = vdwg.mxu0
  %v217 = vadd.f32 %v196, %v215
  %v218 = vtanh.pop %v217
  %219 = vst [vmem:[#allocation2 + $0x10] sm:$0xff] %v218
  %v220 = vld [vmem:[#allocation2 + $0x18] sm:$0xff]
  %221 = vmatpush.msra.mxu0 %v52
  %222 = vmatpush.msra.mxu0 %v51
  %223 = vmatpush.msra.mxu0 %v50
  %224 = vmatpush.msra.mxu0 %v49
  %225 = vmatpush.msra.mxu0 %v48
  %226 = vmatpush.msra.mxu0 %v47
  %227 = vmatpush.msra.mxu0 %v46
  %228 = vmatpush.msra.mxu0 %v45
  %229 = vmatpush.msra.mxu0 %v44
  %230 = vmatpush.msra.mxu0 %v43
  %231 = vmatpush.msra.mxu0 %v42
  %232 = vmatpush.msra.mxu0 %v41
  %233 = vmatpush.msra.mxu0 %v40
  %234 = vmatpush.msra.mxu0 %v39
  %235 = vmatpush.msra.mxu0 %v38
  %236 = vmatpush.msra.mxu0 %v37
  %237 = vmatmul.f32.gmra.mxu0 %v218
  %v238 = vpop.f32.mrf.mxu0
  %v239 = vadd.f32 0.0, %v238
  %240 = vdwg.mxu0
  %v241 = vadd.f32 %v220, %v239
  %v242 = vtanh.pop %v241
  %243 = vst [vmem:[#allocation2 + $0x18] sm:$0xff] %v242
  %v244 = vld [vmem:[#allocation2 + $0x20] sm:$0xff]
  %245 = vmatpush.msra.mxu0 %v52
  %246 = vmatpush.msra.mxu0 %v51
  %247 = vmatpush.msra.mxu0 %v50
  %248 = vmatpush.msra.mxu0 %v49
  %249 = vmatpush.msra.mxu0 %v48
  %250 = vmatpush.msra.mxu0 %v47
  %251 = vmatpush.msra.mxu0 %v46
  %252 = vmatpush.msra.mxu0 %v45
  %253 = vmatpush.msra.mxu0 %v44
  %254 = vmatpush.msra.mxu0 %v43
  %255 = vmatpush.msra.mxu0 %v42
  %256 = vmatpush.msra.mxu0 %v41
  %257 = vmatpush.msra.mxu0 %v40
  %258 = vmatpush.msra.mxu0 %v39
  %259 = vmatpush.msra.mxu0 %v38
  %260 = vmatpush.msra.mxu0 %v37
  %261 = vmatmul.f32.gmra.mxu0 %v242
  %v262 = vpop.f32.mrf.mxu0
  %v263 = vadd.f32 0.0, %v262
  %264 = vdwg.mxu0
  %v265 = vadd.f32 %v244, %v263
  %v266 = vtanh.pop %v265
  %267 = vst [vmem:[#allocation2 + $0x20] sm:$0xff] %v266
  %v268 = vld [vmem:[#allocation2 + $0x28] sm:$0xff]
  %269 = vmatpush.msra.mxu0 %v52
  %270 = vmatpush.msra.mxu0 %v51
  %271 = vmatpush.msra.mxu0 %v50
  %272 = vmatpush.msra.mxu0 %v49
  %273 = vmatpush.msra.mxu0 %v48
  %274 = vmatpush.msra.mxu0 %v47
  %275 = vmatpush.msra.mxu0 %v46
  %276 = vmatpush.msra.mxu0 %v45
  %277 = vmatpush.msra.mxu0 %v44
  %278 = vmatpush.msra.mxu0 %v43
  %279 = vmatpush.msra.mxu0 %v42
  %280 = vmatpush.msra.mxu0 %v41
  %281 = vmatpush.msra.mxu0 %v40
  %282 = vmatpush.msra.mxu0 %v39
  %283 = vmatpush.msra.mxu0 %v38
  %284 = vmatpush.msra.mxu0 %v37
  %285 = vmatmul.f32.gmra.mxu0 %v266
  %v286 = vpop.f32.mrf.mxu0
  %v287 = vadd.f32 0.0, %v286
  %288 = vdwg.mxu0
  %v289 = vadd.f32 %v268, %v287
  %v290 = vtanh.pop %v289
  %291 = vst [vmem:[#allocation2 + $0x28] sm:$0xff] %v290
  %v292 = vld [vmem:[#allocation2 + $0x30] sm:$0xff]
  %293 = vmatpush.msra.mxu0 %v52
  %294 = vmatpush.msra.mxu0 %v51
  %295 = vmatpush.msra.mxu0 %v50
  %296 = vmatpush.msra.mxu0 %v49
  %297 = vmatpush.msra.mxu0 %v48
  %298 = vmatpush.msra.mxu0 %v47
  %299 = vmatpush.msra.mxu0 %v46
  %300 = vmatpush.msra.mxu0 %v45
  %301 = vmatpush.msra.mxu0 %v44
  %302 = vmatpush.msra.mxu0 %v43
  %303 = vmatpush.msra.mxu0 %v42
  %304 = vmatpush.msra.mxu0 %v41
  %305 = vmatpush.msra.mxu0 %v40
  %306 = vmatpush.msra.mxu0 %v39
  %307 = vmatpush.msra.mxu0 %v38
  %308 = vmatpush.msra.mxu0 %v37
  %309 = vmatmul.f32.gmra.mxu0 %v290
  %v310 = vpop.f32.mrf.mxu0
  %v311 = vadd.f32 0.0, %v310
  %312 = vdwg.mxu0
  %v313 = vadd.f32 %v292, %v311
  %v314 = vtanh.pop %v313
  %315 = vst [vmem:[#allocation2 + $0x30] sm:$0xff] %v314
  %v316 = vld [vmem:[#allocation2 + $0x38] sm:$0xff]
  %317 = vmatpush.msra.mxu0 %v52
  %318 = vmatpush.msra.mxu0 %v51
  %319 = vmatpush.msra.mxu0 %v50
  %320 = vmatpush.msra.mxu0 %v49
  %321 = vmatpush.msra.mxu0 %v48
  %322 = vmatpush.msra.mxu0 %v47
  %323 = vmatpush.msra.mxu0 %v46
  %324 = vmatpush.msra.mxu0 %v45
  %325 = vmatpush.msra.mxu0 %v44
  %326 = vmatpush.msra.mxu0 %v43
  %327 = vmatpush.msra.mxu0 %v42
  %328 = vmatpush.msra.mxu0 %v41
  %329 = vmatpush.msra.mxu0 %v40
  %330 = vmatpush.msra.mxu0 %v39
  %331 = vmatpush.msra.mxu0 %v38
  %332 = vmatpush.msra.mxu0 %v37
  %333 = vmatmul.f32.gmra.mxu0 %v314
  %v334 = vpop.f32.mrf.mxu0
  %v335 = vadd.f32 0.0, %v334
  %336 = vdwg.mxu0
  %v337 = vadd.f32 %v316, %v335
  %v338 = vtanh.pop %v337
  %339 = vst [vmem:[#allocation2 + $0x38] sm:$0xff] %v338
  %v340 = vld [vmem:[%s4] sm:$0xff]
  %v341 = vld [vmem:[%s4 + $0x8] sm:$0xff]
  %v342 = vld [vmem:[%s4 + $0x10] sm:$0xff]
  %v343 = vld [vmem:[%s4 + $0x18] sm:$0xff]
  %v344 = vld [vmem:[%s4 + $0x20] sm:$0xff]
  %v345 = vld [vmem:[%s4 + $0x28] sm:$0xff]
  %v346 = vld [vmem:[%s4 + $0x30] sm:$0xff]
  %v347 = vld [vmem:[%s4 + $0x38] sm:$0xff]
  %v348 = vld [vmem:[%s4 + $0x40] sm:$0xff]
  %v349 = vld [vmem:[%s4 + $0x48] sm:$0xff]
  %v350 = vld [vmem:[%s4 + $0x50] sm:$0xff]
  %v351 = vld [vmem:[%s4 + $0x58] sm:$0xff]
  %v352 = vld [vmem:[%s4 + $0x60] sm:$0xff]
  %v353 = vld [vmem:[%s4 + $0x68] sm:$0xff]
  %v354 = vld [vmem:[%s4 + $0x70] sm:$0xff]
  %v355 = vld [vmem:[%s4 + $0x78] sm:$0xff]
  %v356 = vld [vmem:[%s5] sm:$0xff]
  %v357 = vld [vmem:[%s5 + $0x8] sm:$0xff]
  %v358 = vld [vmem:[%s5 + $0x10] sm:$0xff]
  %v359 = vld [vmem:[%s5 + $0x18] sm:$0xff]
  %v360 = vld [vmem:[%s5 + $0x20] sm:$0xff]
  %v361 = vld [vmem:[%s5 + $0x28] sm:$0xff]
  %v362 = vld [vmem:[%s5 + $0x30] sm:$0xff]
  %v363 = vld [vmem:[%s5 + $0x38] sm:$0xff]
  %v364 = vld [vmem:[%s5 + $0x40] sm:$0xff]
  %v365 = vld [vmem:[%s5 + $0x48] sm:$0xff]
  %v366 = vld [vmem:[%s5 + $0x50] sm:$0xff]
  %v367 = vld [vmem:[%s5 + $0x58] sm:$0xff]
  %v368 = vld [vmem:[%s5 + $0x60] sm:$0xff]
  %v369 = vld [vmem:[%s5 + $0x68] sm:$0xff]
  %v370 = vld [vmem:[%s5 + $0x70] sm:$0xff]
  %v371 = vld [vmem:[%s5 + $0x78] sm:$0xff]
  %v372 = vld [vmem:[%s6] sm:$0x1]
  %v373 = vld [vmem:[#allocation2] sm:$0xff]
  %v374 = vld [vmem:[#allocation2 + $0x38] sm:$0xff]
  %v375 = vsel %vm131, %v373, %v374
  %v376 = vld [vmem:[#allocation2 + $0x8] sm:$0xff]
  %v377 = vld [vmem:[#allocation2 + $0x30] sm:$0xff]
  %v378 = vsel %vm131, %v376, %v377
  %v379 = vld [vmem:[#allocation2 + $0x10] sm:$0xff]
  %v380 = vld [vmem:[#allocation2 + $0x28] sm:$0xff]
  %v381 = vsel %vm131, %v379, %v380
  %v382 = vld [vmem:[#allocation2 + $0x18] sm:$0xff]
  %v383 = vld [vmem:[#allocation2 + $0x20] sm:$0xff]
  %v384 = vsel %vm131, %v382, %v383
  %v385 = vsel %vm131, %v383, %v382
  %v386 = vsel %vm131, %v380, %v379
  %v387 = vsel %vm131, %v377, %v376
  %v388 = vsel %vm131, %v374, %v373
  %v390 = vperm.slane %v372, 0
  %392 = vmatpush.msra.mxu0 %v355
  %393 = vmatpush.msra.mxu0 %v354
  %394 = vmatpush.msra.mxu0 %v353
  %395 = vmatpush.msra.mxu0 %v352
  %396 = vmatpush.msra.mxu0 %v351
  %397 = vmatpush.msra.mxu0 %v350
  %398 = vmatpush.msra.mxu0 %v349
  %399 = vmatpush.msra.mxu0 %v348
  %400 = vmatpush.msra.mxu0 %v347
  %401 = vmatpush.msra.mxu0 %v346
  %402 = vmatpush.msra.mxu0 %v345
  %403 = vmatpush.msra.mxu0 %v344
  %404 = vmatpush.msra.mxu0 %v343
  %405 = vmatpush.msra.mxu0 %v342
  %406 = vmatpush.msra.mxu0 %v341
  %407 = vmatpush.msra.mxu0 %v340
  %408 = vmatmul.f32.gmra.mxu0 %v375
  %v409 = vpop.f32.mrf.mxu0
  %v410 = vadd.f32 %v390, %v409
  %411 = vmatmul.f32.gmra.mxu0 %v378
  %v412 = vpop.f32.mrf.mxu0
  %v413 = vadd.f32 %v390, %v412
  %414 = vmatmul.f32.gmra.mxu0 %v381
  %v415 = vpop.f32.mrf.mxu0
  %v416 = vadd.f32 %v390, %v415
  %417 = vmatmul.f32.gmra.mxu0 %v384
  %v418 = vpop.f32.mrf.mxu0
  %v419 = vadd.f32 %v390, %v418
  %420 = vmatmul.f32.gmra.mxu0 %v385
  %v421 = vpop.f32.mrf.mxu0
  %v422 = vadd.f32 %v390, %v421
  %423 = vmatmul.f32.gmra.mxu0 %v386
  %v424 = vpop.f32.mrf.mxu0
  %v425 = vadd.f32 %v390, %v424
  %426 = vmatmul.f32.gmra.mxu0 %v387
  %v427 = vpop.f32.mrf.mxu0
  %v428 = vadd.f32 %v390, %v427
  %429 = vmatmul.f32.gmra.mxu0 %v388
  %v430 = vpop.f32.mrf.mxu0
  %v431 = vadd.f32 %v390, %v430
  %432 = vdwg.mxu0
  %v433 = vsel %vm131, %v410, %v431
  %434 = vst [vmem:[#allocation3] sm:$0xff] %v433
  %v435 = vsel %vm131, %v413, %v428
  %436 = vst [vmem:[#allocation3 + $0x8] sm:$0xff] %v435
  %v437 = vsel %vm131, %v416, %v425
  %438 = vst [vmem:[#allocation3 + $0x10] sm:$0xff] %v437
  %v439 = vsel %vm131, %v419, %v422
  %440 = vst [vmem:[#allocation3 + $0x18] sm:$0xff] %v439
  %v441 = vsel %vm131, %v422, %v419
  %442 = vst [vmem:[#allocation3 + $0x20] sm:$0xff] %v441
  %v443 = vsel %vm131, %v425, %v416
  %444 = vst [vmem:[#allocation3 + $0x28] sm:$0xff] %v443
  %v445 = vsel %vm131, %v428, %v413
  %446 = vst [vmem:[#allocation3 + $0x30] sm:$0xff] %v445
  %v447 = vsel %vm131, %v431, %v410
  %448 = vst [vmem:[#allocation3 + $0x38] sm:$0xff] %v447
  %v449 = vld [vmem:[#allocation3] sm:$0xff]
  %450 = vmatpush.msra.mxu0 %v371
  %451 = vmatpush.msra.mxu0 %v370
  %452 = vmatpush.msra.mxu0 %v369
  %453 = vmatpush.msra.mxu0 %v368
  %454 = vmatpush.msra.mxu0 %v367
  %455 = vmatpush.msra.mxu0 %v366
  %456 = vmatpush.msra.mxu0 %v365
  %457 = vmatpush.msra.mxu0 %v364
  %458 = vmatpush.msra.mxu0 %v363
  %459 = vmatpush.msra.mxu0 %v362
  %460 = vmatpush.msra.mxu0 %v361
  %461 = vmatpush.msra.mxu0 %v360
  %462 = vmatpush.msra.mxu0 %v359
  %463 = vmatpush.msra.mxu0 %v358
  %464 = vmatpush.msra.mxu0 %v357
  %465 = vmatpush.msra.mxu0 %v356
  %466 = vmatmul.f32.gmra.mxu0 0.0
  %v467 = vpop.f32.mrf.mxu0
  %v468 = vadd.f32 0.0, %v467
  %469 = vdwg.mxu0
  %v470 = vadd.f32 %v449, %v468
  %v471 = vtanh.pop %v470
  %472 = vst [vmem:[#allocation3] sm:$0xff] %v471
  %v473 = vld [vmem:[#allocation3 + $0x8] sm:$0xff]
  %474 = vmatpush.msra.mxu0 %v371
  %475 = vmatpush.msra.mxu0 %v370
  %476 = vmatpush.msra.mxu0 %v369
  %477 = vmatpush.msra.mxu0 %v368
  %478 = vmatpush.msra.mxu0 %v367
  %479 = vmatpush.msra.mxu0 %v366
  %480 = vmatpush.msra.mxu0 %v365
  %481 = vmatpush.msra.mxu0 %v364
  %482 = vmatpush.msra.mxu0 %v363
  %483 = vmatpush.msra.mxu0 %v362
  %484 = vmatpush.msra.mxu0 %v361
  %485 = vmatpush.msra.mxu0 %v360
  %486 = vmatpush.msra.mxu0 %v359
  %487 = vmatpush.msra.mxu0 %v358
  %488 = vmatpush.msra.mxu0 %v357
  %489 = vmatpush.msra.mxu0 %v356
  %490 = vmatmul.f32.gmra.mxu0 %v471
  %v491 = vpop.f32.mrf.mxu0
  %v492 = vadd.f32 0.0, %v491
  %493 = vdwg.mxu0
  %v494 = vadd.f32 %v473, %v492
  %v495 = vtanh.pop %v494
  %496 = vst [vmem:[#allocation3 + $0x8] sm:$0xff] %v495
  %v497 = vld [vmem:[#allocation3 + $0x10] sm:$0xff]
  %498 = vmatpush.msra.mxu0 %v371
  %499 = vmatpush.msra.mxu0 %v370
  %500 = vmatpush.msra.mxu0 %v369
  %501 = vmatpush.msra.mxu0 %v368
  %502 = vmatpush.msra.mxu0 %v367
  %503 = vmatpush.msra.mxu0 %v366
  %504 = vmatpush.msra.mxu0 %v365
  %505 = vmatpush.msra.mxu0 %v364
  %506 = vmatpush.msra.mxu0 %v363
  %507 = vmatpush.msra.mxu0 %v362
  %508 = vmatpush.msra.mxu0 %v361
  %509 = vmatpush.msra.mxu0 %v360
  %510 = vmatpush.msra.mxu0 %v359
  %511 = vmatpush.msra.mxu0 %v358
  %512 = vmatpush.msra.mxu0 %v357
  %513 = vmatpush.msra.mxu0 %v356
  %514 = vmatmul.f32.gmra.mxu0 %v495
  %v515 = vpop.f32.mrf.mxu0
  %v516 = vadd.f32 0.0, %v515
  %517 = vdwg.mxu0
  %v518 = vadd.f32 %v497, %v516
  %v519 = vtanh.pop %v518
  %520 = vst [vmem:[#allocation3 + $0x10] sm:$0xff] %v519
  %v521 = vld [vmem:[#allocation3 + $0x18] sm:$0xff]
  %522 = vmatpush.msra.mxu0 %v371
  %523 = vmatpush.msra.mxu0 %v370
  %524 = vmatpush.msra.mxu0 %v369
  %525 = vmatpush.msra.mxu0 %v368
  %526 = vmatpush.msra.mxu0 %v367
  %527 = vmatpush.msra.mxu0 %v366
  %528 = vmatpush.msra.mxu0 %v365
  %529 = vmatpush.msra.mxu0 %v364
  %530 = vmatpush.msra.mxu0 %v363
  %531 = vmatpush.msra.mxu0 %v362
  %532 = vmatpush.msra.mxu0 %v361
  %533 = vmatpush.msra.mxu0 %v360
  %534 = vmatpush.msra.mxu0 %v359
  %535 = vmatpush.msra.mxu0 %v358
  %536 = vmatpush.msra.mxu0 %v357
  %537 = vmatpush.msra.mxu0 %v356
  %538 = vmatmul.f32.gmra.mxu0 %v519
  %v539 = vpop.f32.mrf.mxu0
  %v540 = vadd.f32 0.0, %v539
  %541 = vdwg.mxu0
  %v542 = vadd.f32 %v521, %v540
  %v543 = vtanh.pop %v542
  %544 = vst [vmem:[#allocation3 + $0x18] sm:$0xff] %v543
  %v545 = vld [vmem:[#allocation3 + $0x20] sm:$0xff]
  %546 = vmatpush.msra.mxu0 %v371
  %547 = vmatpush.msra.mxu0 %v370
  %548 = vmatpush.msra.mxu0 %v369
  %549 = vmatpush.msra.mxu0 %v368
  %550 = vmatpush.msra.mxu0 %v367
  %551 = vmatpush.msra.mxu0 %v366
  %552 = vmatpush.msra.mxu0 %v365
  %553 = vmatpush.msra.mxu0 %v364
  %554 = vmatpush.msra.mxu0 %v363
  %555 = vmatpush.msra.mxu0 %v362
  %556 = vmatpush.msra.mxu0 %v361
  %557 = vmatpush.msra.mxu0 %v360
  %558 = vmatpush.msra.mxu0 %v359
  %559 = vmatpush.msra.mxu0 %v358
  %560 = vmatpush.msra.mxu0 %v357
  %561 = vmatpush.msra.mxu0 %v356
  %562 = vmatmul.f32.gmra.mxu0 %v543
  %v563 = vpop.f32.mrf.mxu0
  %v564 = vadd.f32 0.0, %v563
  %565 = vdwg.mxu0
  %v566 = vadd.f32 %v545, %v564
  %v567 = vtanh.pop %v566
  %568 = vst [vmem:[#allocation3 + $0x20] sm:$0xff] %v567
  %v569 = vld [vmem:[#allocation3 + $0x28] sm:$0xff]
  %570 = vmatpush.msra.mxu0 %v371
  %571 = vmatpush.msra.mxu0 %v370
  %572 = vmatpush.msra.mxu0 %v369
  %573 = vmatpush.msra.mxu0 %v368
  %574 = vmatpush.msra.mxu0 %v367
  %575 = vmatpush.msra.mxu0 %v366
  %576 = vmatpush.msra.mxu0 %v365
  %577 = vmatpush.msra.mxu0 %v364
  %578 = vmatpush.msra.mxu0 %v363
  %579 = vmatpush.msra.mxu0 %v362
  %580 = vmatpush.msra.mxu0 %v361
  %581 = vmatpush.msra.mxu0 %v360
  %582 = vmatpush.msra.mxu0 %v359
  %583 = vmatpush.msra.mxu0 %v358
  %584 = vmatpush.msra.mxu0 %v357
  %585 = vmatpush.msra.mxu0 %v356
  %586 = vmatmul.f32.gmra.mxu0 %v567
  %v587 = vpop.f32.mrf.mxu0
  %v588 = vadd.f32 0.0, %v587
  %589 = vdwg.mxu0
  %v590 = vadd.f32 %v569, %v588
  %v591 = vtanh.pop %v590
  %592 = vst [vmem:[#allocation3 + $0x28] sm:$0xff] %v591
  %v593 = vld [vmem:[#allocation3 + $0x30] sm:$0xff]
  %594 = vmatpush.msra.mxu0 %v371
  %595 = vmatpush.msra.mxu0 %v370
  %596 = vmatpush.msra.mxu0 %v369
  %597 = vmatpush.msra.mxu0 %v368
  %598 = vmatpush.msra.mxu0 %v367
  %599 = vmatpush.msra.mxu0 %v366
  %600 = vmatpush.msra.mxu0 %v365
  %601 = vmatpush.msra.mxu0 %v364
  %602 = vmatpush.msra.mxu0 %v363
  %603 = vmatpush.msra.mxu0 %v362
  %604 = vmatpush.msra.mxu0 %v361
  %605 = vmatpush.msra.mxu0 %v360
  %606 = vmatpush.msra.mxu0 %v359
  %607 = vmatpush.msra.mxu0 %v358
  %608 = vmatpush.msra.mxu0 %v357
  %609 = vmatpush.msra.mxu0 %v356
  %610 = vmatmul.f32.gmra.mxu0 %v591
  %v611 = vpop.f32.mrf.mxu0
  %v612 = vadd.f32 0.0, %v611
  %613 = vdwg.mxu0
  %v614 = vadd.f32 %v593, %v612
  %v615 = vtanh.pop %v614
  %616 = vst [vmem:[#allocation3 + $0x30] sm:$0xff] %v615
  %v617 = vld [vmem:[#allocation3 + $0x38] sm:$0xff]
  %618 = vmatpush.msra.mxu0 %v371
  %619 = vmatpush.msra.mxu0 %v370
  %620 = vmatpush.msra.mxu0 %v369
  %621 = vmatpush.msra.mxu0 %v368
  %622 = vmatpush.msra.mxu0 %v367
  %623 = vmatpush.msra.mxu0 %v366
  %624 = vmatpush.msra.mxu0 %v365
  %625 = vmatpush.msra.mxu0 %v364
  %626 = vmatpush.msra.mxu0 %v363
  %627 = vmatpush.msra.mxu0 %v362
  %628 = vmatpush.msra.mxu0 %v361
  %629 = vmatpush.msra.mxu0 %v360
  %630 = vmatpush.msra.mxu0 %v359
  %631 = vmatpush.msra.mxu0 %v358
  %632 = vmatpush.msra.mxu0 %v357
  %633 = vmatpush.msra.mxu0 %v356
  %634 = vmatmul.f32.gmra.mxu0 %v615
  %v635 = vpop.f32.mrf.mxu0
  %v636 = vadd.f32 0.0, %v635
  %637 = vdwg.mxu0
  %v638 = vadd.f32 %v617, %v636
  %v639 = vtanh.pop %v638
  %640 = vst [vmem:[#allocation3 + $0x38] sm:$0xff] %v639
  %v641 = vld [vmem:[#allocation3] sm:$0xff]
  %v642 = vld [vmem:[%s7] sm:$0xff]
  %v643 = vld [vmem:[%s7 + $0x8] sm:$0xff]
  %v644 = vld [vmem:[%s7 + $0x10] sm:$0xff]
  %v645 = vld [vmem:[%s7 + $0x18] sm:$0xff]
  %v646 = vld [vmem:[%s7 + $0x20] sm:$0xff]
  %v647 = vld [vmem:[%s7 + $0x28] sm:$0xff]
  %v648 = vld [vmem:[%s7 + $0x30] sm:$0xff]
  %v649 = vld [vmem:[%s7 + $0x38] sm:$0xff]
  %v650 = vld [vmem:[%s8] sm:$0xff]
  %v651 = vld [vmem:[%s8 + $0x8] sm:$0xff]
  %v652 = vld [vmem:[%s8 + $0x10] sm:$0xff]
  %v653 = vld [vmem:[%s8 + $0x18] sm:$0xff]
  %v654 = vld [vmem:[%s8 + $0x20] sm:$0xff]
  %v655 = vld [vmem:[%s8 + $0x28] sm:$0xff]
  %v656 = vld [vmem:[%s8 + $0x30] sm:$0xff]
  %v657 = vld [vmem:[%s8 + $0x38] sm:$0xff]
  %659 = vrot.lane.b32.xlu0 %v641, 64
  %v660 = vpop.permute.xlu0 %659
  %v661 = vsel %vm131, %v660, 0
  %663 = vmatpush.msra.mxu0 0.0
  %664 = vmatpush.msra.mxu0 0.0
  %665 = vmatpush.msra.mxu0 0.0
  %666 = vmatpush.msra.mxu0 0.0
  %667 = vmatpush.msra.mxu0 0.0
  %668 = vmatpush.msra.mxu0 0.0
  %669 = vmatpush.msra.mxu0 0.0
  %670 = vmatpush.msra.mxu0 0.0
  %671 = vmatpush.msra.mxu0 %v657
  %672 = vmatpush.msra.mxu0 %v656
  %673 = vmatpush.msra.mxu0 %v655
  %674 = vmatpush.msra.mxu0 %v654
  %675 = vmatpush.msra.mxu0 %v653
  %676 = vmatpush.msra.mxu0 %v652
  %677 = vmatpush.msra.mxu0 %v651
  %678 = vmatpush.msra.mxu0 %v650
  %679 = vmatmul.f32.gmra.mxu0 %v661
  %v680 = vpop.f32.mrf.mxu0
  %v681 = vadd.f32 0.0, %v680
  %682 = vdwg.mxu0
  %v684 = vsel %vm131, %v639, 0
  %686 = vmatpush.msra.mxu0 0.0
  %687 = vmatpush.msra.mxu0 0.0
  %688 = vmatpush.msra.mxu0 0.0
  %689 = vmatpush.msra.mxu0 0.0
  %690 = vmatpush.msra.mxu0 0.0
  %691 = vmatpush.msra.mxu0 0.0
  %692 = vmatpush.msra.mxu0 0.0
  %693 = vmatpush.msra.mxu0 0.0
  %694 = vmatpush.msra.mxu0 %v649
  %695 = vmatpush.msra.mxu0 %v648
  %696 = vmatpush.msra.mxu0 %v647
  %697 = vmatpush.msra.mxu0 %v646
  %698 = vmatpush.msra.mxu0 %v645
  %699 = vmatpush.msra.mxu0 %v644
  %700 = vmatpush.msra.mxu0 %v643
  %701 = vmatpush.msra.mxu0 %v642
  %702 = vmatmul.f32.gmra.mxu0 %v684
  %v703 = vpop.f32.mrf.mxu0
  %v704 = vadd.f32 %v681, %v703
  %705 = vdwg.mxu0
  %v706 = vld [vmem:[%s9] sm:$0x1]
  %v708 = vperm.slane %v706, 0
  %v710 = vadd.f32 %v704, %v708
  %711 = vst [vmem:[%s10] sm:$0xff] %v710
  // Predicated region
  $region42: #{birnn_forward.1} parent=0 // pred_check
    _
  $region43: #{birnn_forward.1} parent=0 // pred_check_branch
    %713 = sbr.rel (0) target = $region45
  $region44: #{birnn_forward.1} parent=0 // pred_region
    _
  $region45: #{birnn_forward.1} parent=0 // pred_fallthru
    _
  // Predicated region
  $region46: #{birnn_forward.1} parent=0 // pred_check
    _
  $region47: #{birnn_forward.1} parent=0 // pred_check_branch
    %715 = sbr.rel (0) target = $region49
  $region48: #{birnn_forward.1} parent=0 // pred_region
    _
  $region49: #{birnn_forward.1} parent=0 // pred_fallthru
    _

</llo_original>
